<compile_context>
chip_gen: v6e
topology: v6e:2x2x1
jax: 0.10.0
libtpu: 0.0.40
codegen_flags: <defaults>
</compile_context>

<pallas_src>
import functools

import jax
import jax.numpy as jnp
from jax.experimental import pallas as pl
from jax.experimental.pallas import tpu as pltpu


def _vae_fwd_kernel(
    x_ref, eps_ref,
    w1_ref, b1_ref,
    w2_ref, b2_ref,      # fused [fc21 | fc22]: (n_hidden, 2*n_code), (1, 2*n_code)
    w3_ref, b3_ref,
    w4_ref, b4_ref,
    recon_ref, mulogvar_ref,
):
    n_code = eps_ref.shape[1]

    x = x_ref[...]
    # F.normalize(x, p=1, dim=1): x / max(sum(|x|, dim=1), 1e-12).
    # Per-row reciprocal on the (TB, 1) denom, then a broadcast multiply,
    # instead of a per-element divide over the whole (TB, inp) tile.
    denom = jnp.sum(jnp.abs(x), axis=1, keepdims=True)
    inv = pl.reciprocal(jnp.maximum(denom, 1e-12), approx=False)
    xn = x * inv

    # encode: fc1 -> ReLU -> fused fc21|fc22 (single 2*n_code-wide matmul)
    h1 = jnp.dot(xn, w1_ref[...], preferred_element_type=jnp.float32) + b1_ref[...]
    h1 = jnp.maximum(h1, 0.0)
    mulogvar = (jnp.dot(h1, w2_ref[...], preferred_element_type=jnp.float32)
                + b2_ref[...])
    mu = mulogvar[:, :n_code]
    logvar = mulogvar[:, n_code:]

    # reparametrize: z = eps * exp(0.5 * logvar) + mu
    z = eps_ref[...] * jnp.exp(0.5 * logvar) + mu

    # decode: fc3 -> ReLU -> fc4 -> Sigmoid
    h3 = jnp.dot(z, w3_ref[...], preferred_element_type=jnp.float32) + b3_ref[...]
    h3 = jnp.maximum(h3, 0.0)
    logits = jnp.dot(h3, w4_ref[...], preferred_element_type=jnp.float32) + b4_ref[...]

    recon_ref[...] = jax.nn.sigmoid(logits).astype(recon_ref.dtype)
    mulogvar_ref[...] = mulogvar.astype(mulogvar_ref.dtype)


@functools.partial(jax.jit, static_argnames=("block_b",))
def vae_forward(x, eps, params, *, block_b=128):
    """Run the VAE forward pass with a batch-tiled Pallas kernel.

    x:      (B, inp) float32
    eps:    (B, n_code) float32, standard-normal noise for reparametrization
    params: dict with pre-transposed weights (in, out) and biases (1, out)
    """
    B, inp = x.shape
    n_code = eps.shape[1]
    n_hidden = params["w1"].shape[1]
    out_dim = params["w4"].shape[1]

    # Fuse fc21/fc22 into one lane-dense (n_hidden, 2*n_code) layer.
    w2 = jnp.concatenate([params["w21"], params["w22"]], axis=1)
    b2 = jnp.concatenate([params["b21"], params["b22"]], axis=1)

    # Batch tile: >=128 rows for MXU occupancy when B allows it; otherwise the
    # smallest sublane-aligned tile covering B (small-B case is latency-bound).
    tb = min(block_b, max(8, ((B + 7) // 8) * 8))
    bp = pl.cdiv(B, tb) * tb
    if bp != B:
        # Zero-padded rows are harmless: denom -> 1e-12 clamp, xn == 0.
        x = jnp.pad(x, ((0, bp - B), (0, 0)))
        eps = jnp.pad(eps, ((0, bp - B), (0, 0)))

    grid = (bp // tb,)

    def batch_spec(cols):
        return pl.BlockSpec((tb, cols), lambda i: (i, 0))

    def resident_spec(shape):
        # Constant index_map: weights/biases stay resident in VMEM across steps.
        return pl.BlockSpec(shape, lambda i: (0, 0))

    # Advisory cost hint so XLA schedules surrounding ops around this call.
    flops = 2 * bp * (inp * n_hidden + n_hidden * 2 * n_code
                      + n_code * n_hidden + n_hidden * out_dim)
    transcendentals = bp * (n_code + out_dim)
    bytes_accessed = 4 * (bp * (inp + n_code + out_dim + 2 * n_code)
                          + inp * n_hidden + n_hidden * 2 * n_code
                          + n_code * n_hidden + n_hidden * out_dim)
    cost = pl.CostEstimate(flops=flops, transcendentals=transcendentals,
                           bytes_accessed=bytes_accessed)

    recon, mulogvar = pl.pallas_call(
        _vae_fwd_kernel,
        out_shape=(
            jax.ShapeDtypeStruct((bp, out_dim), jnp.float32),
            jax.ShapeDtypeStruct((bp, 2 * n_code), jnp.float32),
        ),
        grid=grid,
        in_specs=[
            batch_spec(inp),                         # x
            batch_spec(n_code),                      # eps
            resident_spec((inp, n_hidden)),          # w1
            resident_spec((1, n_hidden)),            # b1
            resident_spec((n_hidden, 2 * n_code)),   # w2 (fused fc21|fc22)
            resident_spec((1, 2 * n_code)),          # b2
            resident_spec((n_code, n_hidden)),       # w3
            resident_spec((1, n_hidden)),            # b3
            resident_spec((n_hidden, out_dim)),      # w4
            resident_spec((1, out_dim)),             # b4
        ],
        out_specs=(
            batch_spec(out_dim),                     # recon
            batch_spec(2 * n_code),                  # [mu | logvar], lane-dense
        ),
        compiler_params=pltpu.CompilerParams(
            dimension_semantics=("parallel",),       # v7x: shard batch over 2 TCs
        ),
        cost_estimate=cost,
    )(x, eps,
      params["w1"], params["b1"],
      w2, b2,
      params["w3"], params["b3"],
      params["w4"], params["b4"])

    recon = recon[:B]
    mu = mulogvar[:B, :n_code]
    logvar = mulogvar[:B, n_code:]
    return recon, mu, logvar


def init_vae_params(key, inp, out, n_hidden, n_code, dtype=jnp.float32):
    """Deterministic init mimicking nn.Linear (uniform in +-1/sqrt(fan_in)).
    Weights stored pre-transposed as (in_features, out_features).
    dtype=jnp.bfloat16 is supported on v6e/v7x (matmuls accumulate in f32)."""
    def linear(k, fan_in, fan_out):
        kw, kb = jax.random.split(k)
        bound = 1.0 / jnp.sqrt(fan_in)
        w = jax.random.uniform(kw, (fan_in, fan_out), jnp.float32, -bound, bound)
        b = jax.random.uniform(kb, (1, fan_out), jnp.float32, -bound, bound)
        return w.astype(dtype), b.astype(dtype)

    k1, k21, k22, k3, k4 = jax.random.split(key, 5)
    w1, b1 = linear(k1, inp, n_hidden)
    w21, b21 = linear(k21, n_hidden, n_code)
    w22, b22 = linear(k22, n_hidden, n_code)
    w3, b3 = linear(k3, n_code, n_hidden)
    w4, b4 = linear(k4, n_hidden, out)
    return dict(w1=w1, b1=b1, w21=w21, b21=b21, w22=w22, b22=b22,
                w3=w3, b3=b3, w4=w4, b4=b4)


def vae_forward_ref(x, eps, params):
    """Pure-JAX reference of the same forward pass (for verification)."""
    denom = jnp.sum(jnp.abs(x), axis=1, keepdims=True)
    xn = x / jnp.maximum(denom, 1e-12)
    h1 = jnp.maximum(xn @ params["w1"] + params["b1"], 0.0)
    mu = h1 @ params["w21"] + params["b21"]
    logvar = h1 @ params["w22"] + params["b22"]
    z = eps * jnp.exp(0.5 * logvar) + mu
    h3 = jnp.maximum(z @ params["w3"] + params["b3"], 0.0)
    recon = jax.nn.sigmoid(h3 @ params["w4"] + params["b4"])
    return recon, mu, logvar


if __name__ == "__main__":
    # Small but MXU-friendly shapes for this fully-connected VAE:
    # two 128-row batch tiles, 128-lane-aligned hidden / fused-code dims.
    B = 256        # batch -> grid of 2 tiles of 128 rows
    INP = 256      # inp (== out, reconstruction)
    N_HIDDEN = 128
    N_CODE = 64    # fused mu|logvar slab is 128 lanes wide

    key = jax.random.PRNGKey(0)
    k_x, k_eps, k_params = jax.random.split(key, 3)

    # Bag-of-words-like nonnegative input (what this VAE normally consumes).
    x = jax.random.uniform(k_x, (B, INP), jnp.float32)
    eps = jax.random.normal(k_eps, (B, N_CODE), jnp.float32)
    params = init_vae_params(k_params, INP, INP, N_HIDDEN, N_CODE)

    recon, mu, logvar = jax.block_until_ready(
        vae_forward(x, eps, params, block_b=128))

    # Sanity check against the pure-JAX reference.
    r_ref, mu_ref, lv_ref = vae_forward_ref(x, eps, params)
    assert recon.shape == (B, INP)
    assert mu.shape == (B, N_CODE) and logvar.shape == (B, N_CODE)
    assert jnp.allclose(recon, r_ref, atol=1e-5, rtol=1e-5)
    assert jnp.allclose(mu, mu_ref, atol=1e-5, rtol=1e-5)
    assert jnp.allclose(logvar, lv_ref, atol=1e-5, rtol=1e-5)

    # TODO(synk): conditions.encode_impose (conditions=None path only) has no
    # Pallas equivalent here; the unconditioned forward is implemented.
    print("KERNEL_OK")
</pallas_src>

<mosaic_0001>
module attributes {stable_mosaic.version = 11 : i64} {
  func.func @_vae_fwd_kernel(%arg0: i32, %arg1: memref<128x256xf32, #tpu.memory_space<vmem>>, %arg2: memref<128x64xf32, #tpu.memory_space<vmem>>, %arg3: memref<256x128xf32, #tpu.memory_space<vmem>>, %arg4: memref<1x128xf32, #tpu.memory_space<vmem>>, %arg5: memref<128x128xf32, #tpu.memory_space<vmem>>, %arg6: memref<1x128xf32, #tpu.memory_space<vmem>>, %arg7: memref<64x128xf32, #tpu.memory_space<vmem>>, %arg8: memref<1x128xf32, #tpu.memory_space<vmem>>, %arg9: memref<128x256xf32, #tpu.memory_space<vmem>>, %arg10: memref<1x256xf32, #tpu.memory_space<vmem>>, %arg11: memref<128x256xf32, #tpu.memory_space<vmem>>, %arg12: memref<128x128xf32, #tpu.memory_space<vmem>>) attributes {dimension_semantics = [#tpu.dimension_semantics<parallel>], iteration_bounds = array<i64: 2>, scalar_prefetch = 0 : i64, scratch_operands = 0 : i64, tpu.core_type = #tpu.core_type<tc>, window_params = [{transform_indices = @transform_0, window_bounds = array<i64: 128, 256>}, {transform_indices = @transform_1, window_bounds = array<i64: 128, 64>}, {pipeline_mode = #tpu.pipeline_mode<synchronous>, transform_indices = @transform_2, window_bounds = array<i64: 256, 128>}, {pipeline_mode = #tpu.pipeline_mode<synchronous>, transform_indices = @transform_3, window_bounds = array<i64: 1, 128>}, {pipeline_mode = #tpu.pipeline_mode<synchronous>, transform_indices = @transform_4, window_bounds = array<i64: 128, 128>}, {pipeline_mode = #tpu.pipeline_mode<synchronous>, transform_indices = @transform_5, window_bounds = array<i64: 1, 128>}, {pipeline_mode = #tpu.pipeline_mode<synchronous>, transform_indices = @transform_6, window_bounds = array<i64: 64, 128>}, {pipeline_mode = #tpu.pipeline_mode<synchronous>, transform_indices = @transform_7, window_bounds = array<i64: 1, 128>}, {pipeline_mode = #tpu.pipeline_mode<synchronous>, transform_indices = @transform_8, window_bounds = array<i64: 128, 256>}, {pipeline_mode = #tpu.pipeline_mode<synchronous>, transform_indices = @transform_9, window_bounds = array<i64: 1, 256>}, {transform_indices = @transform_10, window_bounds = array<i64: 128, 256>}, {transform_indices = @transform_11, window_bounds = array<i64: 128, 128>}]} {
    %c0 = arith.constant 0 : index
    %c0_0 = arith.constant 0 : index
    %0 = vector.load %arg1[%c0, %c0_0] : memref<128x256xf32, #tpu.memory_space<vmem>>, vector<128x256xf32>
    %1 = math.absf %0 : vector<128x256xf32>
    %cst = arith.constant dense<0.000000e+00> : vector<128xf32>
    %2 = vector.multi_reduction <add>, %1, %cst [1] : vector<128x256xf32> to vector<128xf32>
    %3 = vector.shape_cast %2 : vector<128xf32> to vector<128x1xf32>
    %cst_1 = arith.constant 9.99999996E-13 : f32
    %4 = vector.broadcast %cst_1 : f32 to vector<128x1xf32>
    %5 = arith.maximumf %3, %4 : vector<128x1xf32>
    %6 = tpu.reciprocal %5 : vector<128x1xf32> -> vector<128x1xf32>
    %7 = vector.broadcast %6 : vector<128x1xf32> to vector<128x256xf32>
    %8 = arith.mulf %0, %7 : vector<128x256xf32>
    %c0_2 = arith.constant 0 : index
    %c0_3 = arith.constant 0 : index
    %9 = vector.load %arg3[%c0_2, %c0_3] : memref<256x128xf32, #tpu.memory_space<vmem>>, vector<256x128xf32>
    %cst_4 = arith.constant dense<0.000000e+00> : vector<128x128xf32>
    %10 = tpu.matmul %8, %9, %cst_4 {dimension_numbers = #tpu.dot_dimension_numbers<[1], [0], [0], [1], [0, 0, 1, 1], [], []>} : vector<128x256xf32>, vector<256x128xf32>, vector<128x128xf32> -> vector<128x128xf32>
    %c0_5 = arith.constant 0 : index
    %c0_6 = arith.constant 0 : index
    %11 = vector.load %arg4[%c0_5, %c0_6] : memref<1x128xf32, #tpu.memory_space<vmem>>, vector<1x128xf32>
    %12 = vector.broadcast %11 : vector<1x128xf32> to vector<128x128xf32>
    %13 = arith.addf %10, %12 : vector<128x128xf32>
    %cst_7 = arith.constant 0.000000e+00 : f32
    %14 = vector.broadcast %cst_7 : f32 to vector<128x128xf32>
    %15 = arith.maximumf %13, %14 : vector<128x128xf32>
    %c0_8 = arith.constant 0 : index
    %c0_9 = arith.constant 0 : index
    %16 = vector.load %arg5[%c0_8, %c0_9] : memref<128x128xf32, #tpu.memory_space<vmem>>, vector<128x128xf32>
    %cst_10 = arith.constant dense<0.000000e+00> : vector<128x128xf32>
    %17 = tpu.matmul %15, %16, %cst_10 {dimension_numbers = #tpu.dot_dimension_numbers<[1], [0], [0], [1], [0, 0, 1, 1], [], []>} : vector<128x128xf32>, vector<128x128xf32>, vector<128x128xf32> -> vector<128x128xf32>
    %c0_11 = arith.constant 0 : index
    %c0_12 = arith.constant 0 : index
    %18 = vector.load %arg6[%c0_11, %c0_12] : memref<1x128xf32, #tpu.memory_space<vmem>>, vector<1x128xf32>
    %19 = vector.broadcast %18 : vector<1x128xf32> to vector<128x128xf32>
    %20 = arith.addf %17, %19 : vector<128x128xf32>
    %21 = vector.extract_strided_slice %20 {offsets = [0, 0], sizes = [128, 64], strides = [1, 1]} : vector<128x128xf32> to vector<128x64xf32>
    %22 = vector.extract_strided_slice %20 {offsets = [0, 64], sizes = [128, 64], strides = [1, 1]} : vector<128x128xf32> to vector<128x64xf32>
    %c0_13 = arith.constant 0 : index
    %c0_14 = arith.constant 0 : index
    %23 = vector.load %arg2[%c0_13, %c0_14] : memref<128x64xf32, #tpu.memory_space<vmem>>, vector<128x64xf32>
    %cst_15 = arith.constant 5.000000e-01 : f32
    %24 = vector.broadcast %cst_15 : f32 to vector<128x64xf32>
    %25 = arith.mulf %24, %22 : vector<128x64xf32>
    %26 = math.exp %25 : vector<128x64xf32>
    %27 = arith.mulf %23, %26 : vector<128x64xf32>
    %28 = arith.addf %27, %21 : vector<128x64xf32>
    %c0_16 = arith.constant 0 : index
    %c0_17 = arith.constant 0 : index
    %29 = vector.load %arg7[%c0_16, %c0_17] : memref<64x128xf32, #tpu.memory_space<vmem>>, vector<64x128xf32>
    %cst_18 = arith.constant dense<0.000000e+00> : vector<128x128xf32>
    %30 = tpu.matmul %28, %29, %cst_18 {dimension_numbers = #tpu.dot_dimension_numbers<[1], [0], [0], [1], [0, 0, 1, 1], [], []>} : vector<128x64xf32>, vector<64x128xf32>, vector<128x128xf32> -> vector<128x128xf32>
    %c0_19 = arith.constant 0 : index
    %c0_20 = arith.constant 0 : index
    %31 = vector.load %arg8[%c0_19, %c0_20] : memref<1x128xf32, #tpu.memory_space<vmem>>, vector<1x128xf32>
    %32 = vector.broadcast %31 : vector<1x128xf32> to vector<128x128xf32>
    %33 = arith.addf %30, %32 : vector<128x128xf32>
    %cst_21 = arith.constant 0.000000e+00 : f32
    %34 = vector.broadcast %cst_21 : f32 to vector<128x128xf32>
    %35 = arith.maximumf %33, %34 : vector<128x128xf32>
    %c0_22 = arith.constant 0 : index
    %c0_23 = arith.constant 0 : index
    %36 = vector.load %arg9[%c0_22, %c0_23] : memref<128x256xf32, #tpu.memory_space<vmem>>, vector<128x256xf32>
    %cst_24 = arith.constant dense<0.000000e+00> : vector<128x256xf32>
    %37 = tpu.matmul %35, %36, %cst_24 {dimension_numbers = #tpu.dot_dimension_numbers<[1], [0], [0], [1], [0, 0, 1, 1], [], []>} : vector<128x128xf32>, vector<128x256xf32>, vector<128x256xf32> -> vector<128x256xf32>
    %c0_25 = arith.constant 0 : index
    %c0_26 = arith.constant 0 : index
    %38 = vector.load %arg10[%c0_25, %c0_26] : memref<1x256xf32, #tpu.memory_space<vmem>>, vector<1x256xf32>
    %39 = vector.broadcast %38 : vector<1x256xf32> to vector<128x256xf32>
    %40 = arith.addf %37, %39 : vector<128x256xf32>
    %41 = arith.negf %40 : vector<128x256xf32>
    %42 = math.exp %41 : vector<128x256xf32>
    %cst_27 = arith.constant 1.000000e+00 : f32
    %43 = vector.broadcast %cst_27 : f32 to vector<128x256xf32>
    %44 = arith.addf %43, %42 : vector<128x256xf32>
    %45 = arith.divf %43, %44 : vector<128x256xf32>
    %c0_28 = arith.constant 0 : index
    %c0_29 = arith.constant 0 : index
    %46 = vector.load %arg11[%c0_28, %c0_29] : memref<128x256xf32, #tpu.memory_space<vmem>>, vector<128x256xf32>
    tpu.vector_store %arg11[%c0_28, %c0_29], %45 {strides = array<i32>} : memref<128x256xf32, #tpu.memory_space<vmem>>, vector<128x256xf32>,
    %c0_30 = arith.constant 0 : index
    %c0_31 = arith.constant 0 : index
    %47 = vector.load %arg12[%c0_30, %c0_31] : memref<128x128xf32, #tpu.memory_space<vmem>>, vector<128x128xf32>
    tpu.vector_store %arg12[%c0_30, %c0_31], %20 {strides = array<i32>} : memref<128x128xf32, #tpu.memory_space<vmem>>, vector<128x128xf32>,
    return
  }
  func.func @transform_0(%arg0: i32) -> (i32, i32) {
    %c0_i32 = arith.constant 0 : i32
    %c0_i32_0 = arith.constant 0 : i32
    return %arg0, %c0_i32 : i32, i32
  }
  func.func @transform_1(%arg0: i32) -> (i32, i32) {
    %c0_i32 = arith.constant 0 : i32
    %c0_i32_0 = arith.constant 0 : i32
    return %arg0, %c0_i32 : i32, i32
  }
  func.func @transform_2(%arg0: i32) -> (i32, i32) {
    %c0_i32 = arith.constant 0 : i32
    %c0_i32_0 = arith.constant 0 : i32
    %c0_i32_1 = arith.constant 0 : i32
    return %c0_i32, %c0_i32_0 : i32, i32
  }
  func.func @transform_3(%arg0: i32) -> (i32, i32) {
    %c0_i32 = arith.constant 0 : i32
    %c0_i32_0 = arith.constant 0 : i32
    %c0_i32_1 = arith.constant 0 : i32
    return %c0_i32, %c0_i32_0 : i32, i32
  }
  func.func @transform_4(%arg0: i32) -> (i32, i32) {
    %c0_i32 = arith.constant 0 : i32
    %c0_i32_0 = arith.constant 0 : i32
    %c0_i32_1 = arith.constant 0 : i32
    return %c0_i32, %c0_i32_0 : i32, i32
  }
  func.func @transform_5(%arg0: i32) -> (i32, i32) {
    %c0_i32 = arith.constant 0 : i32
    %c0_i32_0 = arith.constant 0 : i32
    %c0_i32_1 = arith.constant 0 : i32
    return %c0_i32, %c0_i32_0 : i32, i32
  }
  func.func @transform_6(%arg0: i32) -> (i32, i32) {
    %c0_i32 = arith.constant 0 : i32
    %c0_i32_0 = arith.constant 0 : i32
    %c0_i32_1 = arith.constant 0 : i32
    return %c0_i32, %c0_i32_0 : i32, i32
  }
  func.func @transform_7(%arg0: i32) -> (i32, i32) {
    %c0_i32 = arith.constant 0 : i32
    %c0_i32_0 = arith.constant 0 : i32
    %c0_i32_1 = arith.constant 0 : i32
    return %c0_i32, %c0_i32_0 : i32, i32
  }
  func.func @transform_8(%arg0: i32) -> (i32, i32) {
    %c0_i32 = arith.constant 0 : i32
    %c0_i32_0 = arith.constant 0 : i32
    %c0_i32_1 = arith.constant 0 : i32
    return %c0_i32, %c0_i32_0 : i32, i32
  }
  func.func @transform_9(%arg0: i32) -> (i32, i32) {
    %c0_i32 = arith.constant 0 : i32
    %c0_i32_0 = arith.constant 0 : i32
    %c0_i32_1 = arith.constant 0 : i32
    return %c0_i32, %c0_i32_0 : i32, i32
  }
  func.func @transform_10(%arg0: i32) -> (i32, i32) {
    %c0_i32 = arith.constant 0 : i32
    %c0_i32_0 = arith.constant 0 : i32
    return %arg0, %c0_i32 : i32, i32
  }
  func.func @transform_11(%arg0: i32) -> (i32, i32) {
    %c0_i32 = arith.constant 0 : i32
    %c0_i32_0 = arith.constant 0 : i32
    return %arg0, %c0_i32 : i32, i32
  }
}

</mosaic_0001>

<llo_original>
// kernel: vae_forward.1
$region0: #{vae_forward.1}
  #allocation0 [shape = 'u32[]', space=smem, size = 0x4, offset = 0x4, fixed_abs, tag = 'smem constant byte address 0x4 - core index']
  #allocation1 [shape = 'u32[144,128]{1,0:T(1,128)}', space=vmem, size = 0x12000, scoped, tag = 'internal scratch']
  %s0 = inlined_call_operand.vmem [shape: f32[256,256], index: 0, kind: input, shape index: {}]
  %s1 = inlined_call_operand.vmem [shape: f32[256,64], index: 1, kind: input, shape index: {}]
  %s2 = inlined_call_operand.vmem [shape: f32[256,128], index: 2, kind: input, shape index: {}]
  %s3 = inlined_call_operand.vmem [shape: f32[1,128], index: 3, kind: input, shape index: {}]
  %s4 = inlined_call_operand.vmem [shape: f32[128,128], index: 4, kind: input, shape index: {}]
  %s5 = inlined_call_operand.vmem [shape: f32[1,128], index: 5, kind: input, shape index: {}]
  %s6 = inlined_call_operand.vmem [shape: f32[64,128], index: 6, kind: input, shape index: {}]
  %s7 = inlined_call_operand.vmem [shape: f32[1,128], index: 7, kind: input, shape index: {}]
  %s8 = inlined_call_operand.vmem [shape: f32[128,256], index: 8, kind: input, shape index: {}]
  %s9 = inlined_call_operand.vmem [shape: f32[1,256], index: 9, kind: input, shape index: {}]
  %s10 = inlined_call_operand.hbm [shape: f32[256,256], index: 10, kind: output, shape index: {0}]
  %s11 = inlined_call_operand.vmem [shape: f32[256,128], index: 11, kind: output, shape index: {1}]
  %12 = xla_tuple %s10, %s11
  %s13 = sld [smem:[#allocation0]]
  $region81: #{vae_forward.1} parent=0
    _
  %s15 = ssub.s32 1, %s13
  %s16 = scalar_select 0, %s15, %s13
  $region1: #{vae_forward.1} parent=0
    #allocation2 [shape = 'u8[262144]{0}', space=vmem, size = 0x40000, scoped, tag = 'output window, operand 0']
    #allocation3 [shape = 's32[2]{0}', space=sflag, size = 0x8, scoped, tag = 'scoped memory for vae_forward.1']
    %17 = vsyncpa [#allocation3], 0
    %s18 = scalar_lea.sflag [#allocation3], 1
    %19 = vsyncpa %s18, 0
    loop: start=0, step=1, limit=4
    $region2: #{vae_forward.1} parent=1 // loop_pre_header
      _
    $region3: #{vae_forward.1} parent=1 // loop_header
      %s21 = sphi 0, %s25
      %p22 = scmp.ge.s32.totalorder %s21, 4
      %s31 = sphi 0, %s33
      %s34 = sphi 0, %s31
      %s35 = sphi 0, %s34
      %s51 = sphi 0, %s35
      %s57 = sphi 0, %s59
      %s60 = sphi 0, %s57
      %s61 = sphi 0, %s60
      %s77 = sphi 0, %s61
      %s81 = sphi 0, %s81
      %s83 = sphi 0, %s81
      %s84 = sphi 0, %s83
      %s98 = sphi 0, %s84
      %s102 = sphi 0, %s102
      %s104 = sphi 0, %s102
      %s105 = sphi 0, %s104
      %s119 = sphi 0, %s105
      %s123 = sphi 0, %s123
      %s125 = sphi 0, %s123
      %s126 = sphi 0, %s125
      %s140 = sphi 0, %s126
      %s144 = sphi 0, %s144
      %s146 = sphi 0, %s144
      %s147 = sphi 0, %s146
      %s161 = sphi 0, %s147
      %s165 = sphi 0, %s165
      %s167 = sphi 0, %s165
      %s168 = sphi 0, %s167
      %s182 = sphi 0, %s168
      %s186 = sphi 0, %s186
      %s188 = sphi 0, %s186
      %s189 = sphi 0, %s188
      %s203 = sphi 0, %s189
      %s207 = sphi 0, %s207
      %s209 = sphi 0, %s207
      %s210 = sphi 0, %s209
      %s224 = sphi 0, %s210
      %s228 = sphi 0, %s228
      %s230 = sphi 0, %s228
      %s231 = sphi 0, %s230
      %s245 = sphi 0, %s231
      %s251 = sphi 0, %s253
      %s254 = sphi 0, %s251
      %s255 = sphi 0, %s254
      %s271 = sphi 0, %s255
      %s277 = sphi 0, %s279
      %s280 = sphi 0, %s277
      %s281 = sphi 0, %s280
      %s297 = sphi 0, %s281
    $region4: #{vae_forward.1} parent=1 // loop_header_branch
      %24 = sbr.rel (%p22) target = $region8
    $region5: #{vae_forward.1} parent=1 // loop_body
      %s26 = ssub.s32 %s21, 1
      %s27 = ssub.s32 %s21, 2
      %s28 = sadd.s32 %s21, 1
      %s29 = ssub.s32 %s21, %s28
      %p30 = scmp.eq.s32.totalorder %s29, 0
      %s32 = sadd.s32 %s31, 1
      %s33 = scalar_select %p30, %s31, %s32
      %p36 = pneg %p30
      %p37 = scmp.eq.s32.totalorder %s21, 1
      %p38 = por %p36, %p37
      %p39 = scmp.ne.s32.totalorder %s31, %s34
      %p40 = scmp.eq.s32.totalorder %s21, 0
      %p41 = por %p39, %p40
      %p42 = scmp.ne.s32.totalorder %s31, %s34
      %p43 = scmp.eq.s32.totalorder %s26, 1
      %p44 = por %p42, %p43
      %p45 = scmp.ne.s32.totalorder %s34, %s35
      %p46 = scmp.eq.s32.totalorder %s26, 0
      %p47 = por %p45, %p46
      %p48 = scmp.ne.s32.totalorder %s34, %s35
      %p49 = scmp.eq.s32.totalorder %s27, 1
      %p50 = por %p48, %p49
      %p52 = scmp.ne.s32.totalorder %s35, %s51
      %p53 = scmp.eq.s32.totalorder %s27, 0
      %p54 = por %p52, %p53
      %s55 = ssub.s32 %s21, %s28
      %p56 = scmp.eq.s32.totalorder %s55, 0
      %s58 = sadd.s32 %s57, 1
      %s59 = scalar_select %p56, %s57, %s58
      %p62 = pneg %p56
      %p63 = scmp.eq.s32.totalorder %s21, 1
      %p64 = por %p62, %p63
      %p65 = scmp.ne.s32.totalorder %s57, %s60
      %p66 = scmp.eq.s32.totalorder %s21, 0
      %p67 = por %p65, %p66
      %p68 = scmp.ne.s32.totalorder %s57, %s60
      %p69 = scmp.eq.s32.totalorder %s26, 1
      %p70 = por %p68, %p69
      %p71 = scmp.ne.s32.totalorder %s60, %s61
      %p72 = scmp.eq.s32.totalorder %s26, 0
      %p73 = por %p71, %p72
      %p74 = scmp.ne.s32.totalorder %s60, %s61
      %p75 = scmp.eq.s32.totalorder %s27, 1
      %p76 = por %p74, %p75
      %p78 = scmp.ne.s32.totalorder %s61, %s77
      %p79 = scmp.eq.s32.totalorder %s27, 0
      %p80 = por %p78, %p79
      %s82 = sadd.s32 %s81, 1
      %p85 = scmp.eq.s32.totalorder %s21, 1
      %p86 = scmp.ne.s32.totalorder %s81, %s83
      %p87 = scmp.eq.s32.totalorder %s21, 0
      %p88 = por %p86, %p87
      %p89 = scmp.ne.s32.totalorder %s81, %s83
      %p90 = scmp.eq.s32.totalorder %s26, 1
      %p91 = por %p89, %p90
      %p92 = scmp.ne.s32.totalorder %s83, %s84
      %p93 = scmp.eq.s32.totalorder %s26, 0
      %p94 = por %p92, %p93
      %p95 = scmp.ne.s32.totalorder %s83, %s84
      %p96 = scmp.eq.s32.totalorder %s27, 1
      %p97 = por %p95, %p96
      %p99 = scmp.ne.s32.totalorder %s84, %s98
      %p100 = scmp.eq.s32.totalorder %s27, 0
      %p101 = por %p99, %p100
      %s103 = sadd.s32 %s102, 1
      %p106 = scmp.eq.s32.totalorder %s21, 1
      %p107 = scmp.ne.s32.totalorder %s102, %s104
      %p108 = scmp.eq.s32.totalorder %s21, 0
      %p109 = por %p107, %p108
      %p110 = scmp.ne.s32.totalorder %s102, %s104
      %p111 = scmp.eq.s32.totalorder %s26, 1
      %p112 = por %p110, %p111
      %p113 = scmp.ne.s32.totalorder %s104, %s105
      %p114 = scmp.eq.s32.totalorder %s26, 0
      %p115 = por %p113, %p114
      %p116 = scmp.ne.s32.totalorder %s104, %s105
      %p117 = scmp.eq.s32.totalorder %s27, 1
      %p118 = por %p116, %p117
      %p120 = scmp.ne.s32.totalorder %s105, %s119
      %p121 = scmp.eq.s32.totalorder %s27, 0
      %p122 = por %p120, %p121
      %s124 = sadd.s32 %s123, 1
      %p127 = scmp.eq.s32.totalorder %s21, 1
      %p128 = scmp.ne.s32.totalorder %s123, %s125
      %p129 = scmp.eq.s32.totalorder %s21, 0
      %p130 = por %p128, %p129
      %p131 = scmp.ne.s32.totalorder %s123, %s125
      %p132 = scmp.eq.s32.totalorder %s26, 1
      %p133 = por %p131, %p132
      %p134 = scmp.ne.s32.totalorder %s125, %s126
      %p135 = scmp.eq.s32.totalorder %s26, 0
      %p136 = por %p134, %p135
      %p137 = scmp.ne.s32.totalorder %s125, %s126
      %p138 = scmp.eq.s32.totalorder %s27, 1
      %p139 = por %p137, %p138
      %p141 = scmp.ne.s32.totalorder %s126, %s140
      %p142 = scmp.eq.s32.totalorder %s27, 0
      %p143 = por %p141, %p142
      %s145 = sadd.s32 %s144, 1
      %p148 = scmp.eq.s32.totalorder %s21, 1
      %p149 = scmp.ne.s32.totalorder %s144, %s146
      %p150 = scmp.eq.s32.totalorder %s21, 0
      %p151 = por %p149, %p150
      %p152 = scmp.ne.s32.totalorder %s144, %s146
      %p153 = scmp.eq.s32.totalorder %s26, 1
      %p154 = por %p152, %p153
      %p155 = scmp.ne.s32.totalorder %s146, %s147
      %p156 = scmp.eq.s32.totalorder %s26, 0
      %p157 = por %p155, %p156
      %p158 = scmp.ne.s32.totalorder %s146, %s147
      %p159 = scmp.eq.s32.totalorder %s27, 1
      %p160 = por %p158, %p159
      %p162 = scmp.ne.s32.totalorder %s147, %s161
      %p163 = scmp.eq.s32.totalorder %s27, 0
      %p164 = por %p162, %p163
      %s166 = sadd.s32 %s165, 1
      %p169 = scmp.eq.s32.totalorder %s21, 1
      %p170 = scmp.ne.s32.totalorder %s165, %s167
      %p171 = scmp.eq.s32.totalorder %s21, 0
      %p172 = por %p170, %p171
      %p173 = scmp.ne.s32.totalorder %s165, %s167
      %p174 = scmp.eq.s32.totalorder %s26, 1
      %p175 = por %p173, %p174
      %p176 = scmp.ne.s32.totalorder %s167, %s168
      %p177 = scmp.eq.s32.totalorder %s26, 0
      %p178 = por %p176, %p177
      %p179 = scmp.ne.s32.totalorder %s167, %s168
      %p180 = scmp.eq.s32.totalorder %s27, 1
      %p181 = por %p179, %p180
      %p183 = scmp.ne.s32.totalorder %s168, %s182
      %p184 = scmp.eq.s32.totalorder %s27, 0
      %p185 = por %p183, %p184
      %s187 = sadd.s32 %s186, 1
      %p190 = scmp.eq.s32.totalorder %s21, 1
      %p191 = scmp.ne.s32.totalorder %s186, %s188
      %p192 = scmp.eq.s32.totalorder %s21, 0
      %p193 = por %p191, %p192
      %p194 = scmp.ne.s32.totalorder %s186, %s188
      %p195 = scmp.eq.s32.totalorder %s26, 1
      %p196 = por %p194, %p195
      %p197 = scmp.ne.s32.totalorder %s188, %s189
      %p198 = scmp.eq.s32.totalorder %s26, 0
      %p199 = por %p197, %p198
      %p200 = scmp.ne.s32.totalorder %s188, %s189
      %p201 = scmp.eq.s32.totalorder %s27, 1
      %p202 = por %p200, %p201
      %p204 = scmp.ne.s32.totalorder %s189, %s203
      %p205 = scmp.eq.s32.totalorder %s27, 0
      %p206 = por %p204, %p205
      %s208 = sadd.s32 %s207, 1
      %p211 = scmp.eq.s32.totalorder %s21, 1
      %p212 = scmp.ne.s32.totalorder %s207, %s209
      %p213 = scmp.eq.s32.totalorder %s21, 0
      %p214 = por %p212, %p213
      %p215 = scmp.ne.s32.totalorder %s207, %s209
      %p216 = scmp.eq.s32.totalorder %s26, 1
      %p217 = por %p215, %p216
      %p218 = scmp.ne.s32.totalorder %s209, %s210
      %p219 = scmp.eq.s32.totalorder %s26, 0
      %p220 = por %p218, %p219
      %p221 = scmp.ne.s32.totalorder %s209, %s210
      %p222 = scmp.eq.s32.totalorder %s27, 1
      %p223 = por %p221, %p222
      %p225 = scmp.ne.s32.totalorder %s210, %s224
      %p226 = scmp.eq.s32.totalorder %s27, 0
      %p227 = por %p225, %p226
      %s229 = sadd.s32 %s228, 1
      %p232 = scmp.eq.s32.totalorder %s21, 1
      %p233 = scmp.ne.s32.totalorder %s228, %s230
      %p234 = scmp.eq.s32.totalorder %s21, 0
      %p235 = por %p233, %p234
      %p236 = scmp.ne.s32.totalorder %s228, %s230
      %p237 = scmp.eq.s32.totalorder %s26, 1
      %p238 = por %p236, %p237
      %p239 = scmp.ne.s32.totalorder %s230, %s231
      %p240 = scmp.eq.s32.totalorder %s26, 0
      %p241 = por %p239, %p240
      %p242 = scmp.ne.s32.totalorder %s230, %s231
      %p243 = scmp.eq.s32.totalorder %s27, 1
      %p244 = por %p242, %p243
      %p246 = scmp.ne.s32.totalorder %s231, %s245
      %p247 = scmp.eq.s32.totalorder %s27, 0
      %p248 = por %p246, %p247
      %s249 = ssub.s32 %s21, %s28
      %p250 = scmp.eq.s32.totalorder %s249, 0
      %s252 = sadd.s32 %s251, 1
      %s253 = scalar_select %p250, %s251, %s252
      %p256 = pneg %p250
      %p257 = scmp.eq.s32.totalorder %s21, 1
      %p258 = por %p256, %p257
      %p259 = scmp.ne.s32.totalorder %s251, %s254
      %p260 = scmp.eq.s32.totalorder %s21, 0
      %p261 = por %p259, %p260
      %p262 = scmp.ne.s32.totalorder %s251, %s254
      %p263 = scmp.eq.s32.totalorder %s26, 1
      %p264 = por %p262, %p263
      %p265 = scmp.ne.s32.totalorder %s254, %s255
      %p266 = scmp.eq.s32.totalorder %s26, 0
      %p267 = por %p265, %p266
      %p268 = scmp.ne.s32.totalorder %s254, %s255
      %p269 = scmp.eq.s32.totalorder %s27, 1
      %p270 = por %p268, %p269
      %p272 = scmp.ne.s32.totalorder %s255, %s271
      %p273 = scmp.eq.s32.totalorder %s27, 0
      %p274 = por %p272, %p273
      %s275 = ssub.s32 %s21, %s28
      %p276 = scmp.eq.s32.totalorder %s275, 0
      %s278 = sadd.s32 %s277, 1
      %s279 = scalar_select %p276, %s277, %s278
      %p282 = pneg %p276
      %p283 = scmp.eq.s32.totalorder %s21, 1
      %p284 = por %p282, %p283
      %p285 = scmp.ne.s32.totalorder %s277, %s280
      %p286 = scmp.eq.s32.totalorder %s21, 0
      %p287 = por %p285, %p286
      %p288 = scmp.ne.s32.totalorder %s277, %s280
      %p289 = scmp.eq.s32.totalorder %s26, 1
      %p290 = por %p288, %p289
      %p291 = scmp.ne.s32.totalorder %s280, %s281
      %p292 = scmp.eq.s32.totalorder %s26, 0
      %p293 = por %p291, %p292
      %p294 = scmp.ne.s32.totalorder %s280, %s281
      %p295 = scmp.eq.s32.totalorder %s27, 1
      %p296 = por %p294, %p295
      %p298 = scmp.ne.s32.totalorder %s281, %s297
      %p299 = scmp.eq.s32.totalorder %s27, 0
      %p300 = por %p298, %p299
      %p301 = scmp.le.s32.totalorder 1, %s21
      %p302 = scmp.lt.s32.totalorder %s21, 3
      %p303 = pnand %p301, %p302
      %p304 = pneg %p303
      // Predicated region
      $region9: #{vae_forward.1} parent=5 // pred_check
        _
      $region10: #{vae_forward.1} parent=5 // pred_check_branch
        %306 = sbr.rel (%p303) target = $region12
      $region11: #{vae_forward.1} parent=5 // pred_region
        %s307 = ssub.s32 %s21, 1
        // Predicated region
        $region13: #{vae_forward.1} parent=11 // pred_check
          %p308 = pneg %p94
        $region14: #{vae_forward.1} parent=11 // pred_check_branch
          %310 = sbr.rel (%p308) target = $region16
        $region15: #{vae_forward.1} parent=11 // pred_region
          _
        $region16: #{vae_forward.1} parent=11 // pred_fallthru
          _
        // Predicated region
        $region17: #{vae_forward.1} parent=11 // pred_check
          %p311 = pneg %p115
        $region18: #{vae_forward.1} parent=11 // pred_check_branch
          %313 = sbr.rel (%p311) target = $region20
        $region19: #{vae_forward.1} parent=11 // pred_region
          _
        $region20: #{vae_forward.1} parent=11 // pred_fallthru
          _
        // Predicated region
        $region21: #{vae_forward.1} parent=11 // pred_check
          %p314 = pneg %p136
        $region22: #{vae_forward.1} parent=11 // pred_check_branch
          %316 = sbr.rel (%p314) target = $region24
        $region23: #{vae_forward.1} parent=11 // pred_region
          _
        $region24: #{vae_forward.1} parent=11 // pred_fallthru
          _
        // Predicated region
        $region25: #{vae_forward.1} parent=11 // pred_check
          %p317 = pneg %p157
        $region26: #{vae_forward.1} parent=11 // pred_check_branch
          %319 = sbr.rel (%p317) target = $region28
        $region27: #{vae_forward.1} parent=11 // pred_region
          _
        $region28: #{vae_forward.1} parent=11 // pred_fallthru
          _
        // Predicated region
        $region29: #{vae_forward.1} parent=11 // pred_check
          %p320 = pneg %p178
        $region30: #{vae_forward.1} parent=11 // pred_check_branch
          %322 = sbr.rel (%p320) target = $region32
        $region31: #{vae_forward.1} parent=11 // pred_region
          _
        $region32: #{vae_forward.1} parent=11 // pred_fallthru
          _
        // Predicated region
        $region33: #{vae_forward.1} parent=11 // pred_check
          %p323 = pneg %p199
        $region34: #{vae_forward.1} parent=11 // pred_check_branch
          %325 = sbr.rel (%p323) target = $region36
        $region35: #{vae_forward.1} parent=11 // pred_region
          _
        $region36: #{vae_forward.1} parent=11 // pred_fallthru
          _
        // Predicated region
        $region37: #{vae_forward.1} parent=11 // pred_check
          %p326 = pneg %p220
        $region38: #{vae_forward.1} parent=11 // pred_check_branch
          %328 = sbr.rel (%p326) target = $region40
        $region39: #{vae_forward.1} parent=11 // pred_region
          _
        $region40: #{vae_forward.1} parent=11 // pred_fallthru
          _
        // Predicated region
        $region41: #{vae_forward.1} parent=11 // pred_check
          %p329 = pneg %p241
        $region42: #{vae_forward.1} parent=11 // pred_check_branch
          %331 = sbr.rel (%p329) target = $region44
        $region43: #{vae_forward.1} parent=11 // pred_region
          _
        $region44: #{vae_forward.1} parent=11 // pred_fallthru
          _
      $region12: #{vae_forward.1} parent=5 // pred_fallthru
        _
      %p332 = scmp.lt.s32.totalorder %s21, 2
      // Predicated region
      $region45: #{vae_forward.1} parent=5 // pred_check
        %p333 = pneg %p332
      $region46: #{vae_forward.1} parent=5 // pred_check_branch
        %335 = sbr.rel (%p333) target = $region48
      $region47: #{vae_forward.1} parent=5 // pred_region
        // Predicated region
        $region49: #{vae_forward.1} parent=47 // pred_check
          %p336 = pneg %p41
        $region50: #{vae_forward.1} parent=47 // pred_check_branch
          %338 = sbr.rel (%p336) target = $region52
        $region51: #{vae_forward.1} parent=47 // pred_region
          %s339 = smul.u32 16, %s21
          %p340 = scmp.lt.s32.totalorder %s339, 31
          %s341 = scalar_select %p340, %s339, 31
          %s342 = smul.addr %s341, 2
          %s343 = smul.addr %s342, 8
          %s344 = scalar_lea.vmem %s0, %s343
          %s345 = smul.u32 16, %s21
        $region52: #{vae_forward.1} parent=47 // pred_fallthru
          _
        // Predicated region
        $region53: #{vae_forward.1} parent=47 // pred_check
          %p346 = pneg %p67
        $region54: #{vae_forward.1} parent=47 // pred_check_branch
          %348 = sbr.rel (%p346) target = $region56
        $region55: #{vae_forward.1} parent=47 // pred_region
          %s349 = smul.u32 16, %s21
          %p350 = scmp.lt.s32.totalorder %s349, 31
          %s351 = scalar_select %p350, %s349, 31
          %s352 = smul.addr %s351, 8
          %s353 = scalar_lea.vmem %s1, %s352
          %s354 = smul.u32 16, %s21
        $region56: #{vae_forward.1} parent=47 // pred_fallthru
          _
      $region48: #{vae_forward.1} parent=5 // pred_fallthru
        _
      %p355 = scmp.le.s32.totalorder 1, %s21
      %p356 = scmp.lt.s32.totalorder %s21, 3
      %p357 = pnand %p355, %p356
      %p358 = pneg %p357
      // Predicated region
      $region57: #{vae_forward.1} parent=5 // pred_check
        _
      $region58: #{vae_forward.1} parent=5 // pred_check_branch
        %360 = sbr.rel (%p357) target = $region60
      $region59: #{vae_forward.1} parent=5 // pred_region
        %s361 = ssub.s32 %s21, 1
        %s362 = smul.u32 16, %s26
        %p363 = scmp.lt.s32.totalorder %s362, 31
        %s364 = scalar_select %p363, %s362, 31
        %s365 = smul.addr %s364, 2
        %s366 = smul.addr %s365, 8
        %s367 = scalar_lea.vmem %s0, %s366
        %p368 = pneg %p47
        %p369 = pneg %p44
        %s370 = smul.u32 16, %s26
        %p371 = scmp.lt.s32.totalorder %s370, 31
        %s372 = scalar_select %p371, %s370, 31
        %s373 = smul.addr %s372, 8
        %s374 = scalar_lea.vmem %s1, %s373
        %p375 = pneg %p73
        %p376 = pneg %p70
        %p377 = pneg %p94
        %p378 = pneg %p91
        %p379 = pneg %p115
        %p380 = pneg %p112
        %p381 = pneg %p136
        %p382 = pneg %p133
        %p383 = pneg %p157
        %p384 = pneg %p154
        %p385 = pneg %p178
        %p386 = pneg %p175
        %p387 = pneg %p199
        %p388 = pneg %p196
        %p389 = pneg %p220
        %p390 = pneg %p217
        %p391 = pneg %p241
        %p392 = pneg %p238
        %p393 = pneg %p267
        %p394 = pneg %p264
        %s395 = sand.u32 %s254, 1
        %s396 = scalar_lea.sflag [#allocation3], %s395
        %s397 = sand.u32 %s254, 1
        %s398 = smul.addr %s397, 256
        %s399 = scalar_lea.vmem [#allocation2], %s398
        %p400 = pneg %p293
        %p401 = pneg %p290
        %s402 = smul.u32 16, %s26
        %p403 = scmp.lt.s32.totalorder %s402, 31
        %s404 = scalar_select %p403, %s402, 31
        %s405 = smul.addr %s404, 8
        %s406 = scalar_lea.vmem %s11, %s405
        %s407 = smul.u32 16, %s26
        %p408 = scmp.lt.s32.totalorder %s407, 31
        %s409 = scalar_select %p408, %s407, 31
        %s410 = smul.addr %s409, 2
        %s411 = smul.addr %s410, 8
        %s412 = scalar_lea.vmem %s0, %s411
        %s413 = smul.u32 16, %s26
        %s414 = smul.u32 16, %s26
        %p415 = scmp.lt.s32.totalorder %s414, 31
        %s416 = scalar_select %p415, %s414, 31
        %s417 = smul.addr %s416, 8
        %s418 = scalar_lea.vmem %s1, %s417
        %s419 = smul.u32 16, %s26
        %s420 = smul.u32 16, %s26
        %s421 = smul.u32 16, %s26
        %p422 = scmp.lt.s32.totalorder %s421, 31
        %s423 = scalar_select %p422, %s421, 31
        %s424 = smul.addr %s423, 8
        %s425 = scalar_lea.vmem %s11, %s424
        %s426 = smul.u32 16, %s26
        %v427 = vld [vmem:[%s412] sm:$0xff]
        %v428 = vld [vmem:[%s412 + $0x8] sm:$0xff]
        %v429 = vld [vmem:[%s412 + $0x10] sm:$0xff]
        %v430 = vld [vmem:[%s412 + $0x18] sm:$0xff]
        %v431 = vld [vmem:[%s412 + $0x20] sm:$0xff]
        %v432 = vld [vmem:[%s412 + $0x28] sm:$0xff]
        %v433 = vld [vmem:[%s412 + $0x30] sm:$0xff]
        %v434 = vld [vmem:[%s412 + $0x38] sm:$0xff]
        %v435 = vld [vmem:[%s412 + $0x40] sm:$0xff]
        %v436 = vld [vmem:[%s412 + $0x48] sm:$0xff]
        %v437 = vld [vmem:[%s412 + $0x50] sm:$0xff]
        %v438 = vld [vmem:[%s412 + $0x58] sm:$0xff]
        %v439 = vld [vmem:[%s412 + $0x60] sm:$0xff]
        %v440 = vld [vmem:[%s412 + $0x68] sm:$0xff]
        %v441 = vld [vmem:[%s412 + $0x70] sm:$0xff]
        %v442 = vld [vmem:[%s412 + $0x78] sm:$0xff]
        %v443 = vld [vmem:[%s412 + $0x80] sm:$0xff]
        %v444 = vld [vmem:[%s412 + $0x88] sm:$0xff]
        %v445 = vld [vmem:[%s412 + $0x90] sm:$0xff]
        %v446 = vld [vmem:[%s412 + $0x98] sm:$0xff]
        %v447 = vld [vmem:[%s412 + $0xa0] sm:$0xff]
        %v448 = vld [vmem:[%s412 + $0xa8] sm:$0xff]
        %v449 = vld [vmem:[%s412 + $0xb0] sm:$0xff]
        %v450 = vld [vmem:[%s412 + $0xb8] sm:$0xff]
        %v451 = vld [vmem:[%s412 + $0xc0] sm:$0xff]
        %v452 = vld [vmem:[%s412 + $0xc8] sm:$0xff]
        %v453 = vld [vmem:[%s412 + $0xd0] sm:$0xff]
        %v454 = vld [vmem:[%s412 + $0xd8] sm:$0xff]
        %v455 = vld [vmem:[%s412 + $0xe0] sm:$0xff]
        %v456 = vld [vmem:[%s412 + $0xe8] sm:$0xff]
        %v457 = vld [vmem:[%s412 + $0xf0] sm:$0xff]
        %v458 = vld [vmem:[%s412 + $0xf8] sm:$0xff]
        %v459 = vand.u32 2147483647, %v427
        %v460 = vand.u32 2147483647, %v428
        %v461 = vand.u32 2147483647, %v429
        %v462 = vand.u32 2147483647, %v430
        %v463 = vand.u32 2147483647, %v431
        %v464 = vand.u32 2147483647, %v432
        %v465 = vand.u32 2147483647, %v433
        %v466 = vand.u32 2147483647, %v434
        %v467 = vand.u32 2147483647, %v435
        %v468 = vand.u32 2147483647, %v436
        %v469 = vand.u32 2147483647, %v437
        %v470 = vand.u32 2147483647, %v438
        %v471 = vand.u32 2147483647, %v439
        %v472 = vand.u32 2147483647, %v440
        %v473 = vand.u32 2147483647, %v441
        %v474 = vand.u32 2147483647, %v442
        %v475 = vand.u32 2147483647, %v443
        %v476 = vand.u32 2147483647, %v444
        %v477 = vand.u32 2147483647, %v445
        %v478 = vand.u32 2147483647, %v446
        %v479 = vand.u32 2147483647, %v447
        %v480 = vand.u32 2147483647, %v448
        %v481 = vand.u32 2147483647, %v449
        %v482 = vand.u32 2147483647, %v450
        %v483 = vand.u32 2147483647, %v451
        %v484 = vand.u32 2147483647, %v452
        %v485 = vand.u32 2147483647, %v453
        %v486 = vand.u32 2147483647, %v454
        %v487 = vand.u32 2147483647, %v455
        %v488 = vand.u32 2147483647, %v456
        %v489 = vand.u32 2147483647, %v457
        %v490 = vand.u32 2147483647, %v458
        %v491 = vadd.f32 %v459, %v460
        %492 = vadd.xlane.f32.xlu0 %v491
        %v493 = vpop.xlane.xlu0 %492
        %v494 = vadd.f32 %v461, %v462
        %495 = vadd.xlane.f32.xlu0 %v494
        %v496 = vpop.xlane.xlu0 %495
        %v497 = vadd.f32 %v463, %v464
        %498 = vadd.xlane.f32.xlu0 %v497
        %v499 = vpop.xlane.xlu0 %498
        %v500 = vadd.f32 %v465, %v466
        %501 = vadd.xlane.f32.xlu0 %v500
        %v502 = vpop.xlane.xlu0 %501
        %v503 = vadd.f32 %v467, %v468
        %504 = vadd.xlane.f32.xlu0 %v503
        %v505 = vpop.xlane.xlu0 %504
        %v506 = vadd.f32 %v469, %v470
        %507 = vadd.xlane.f32.xlu0 %v506
        %v508 = vpop.xlane.xlu0 %507
        %v509 = vadd.f32 %v471, %v472
        %510 = vadd.xlane.f32.xlu0 %v509
        %v511 = vpop.xlane.xlu0 %510
        %v512 = vadd.f32 %v473, %v474
        %513 = vadd.xlane.f32.xlu0 %v512
        %v514 = vpop.xlane.xlu0 %513
        %v515 = vadd.f32 %v475, %v476
        %516 = vadd.xlane.f32.xlu0 %v515
        %v517 = vpop.xlane.xlu0 %516
        %v518 = vadd.f32 %v477, %v478
        %519 = vadd.xlane.f32.xlu0 %v518
        %v520 = vpop.xlane.xlu0 %519
        %v521 = vadd.f32 %v479, %v480
        %522 = vadd.xlane.f32.xlu0 %v521
        %v523 = vpop.xlane.xlu0 %522
        %v524 = vadd.f32 %v481, %v482
        %525 = vadd.xlane.f32.xlu0 %v524
        %v526 = vpop.xlane.xlu0 %525
        %v527 = vadd.f32 %v483, %v484
        %528 = vadd.xlane.f32.xlu0 %v527
        %v529 = vpop.xlane.xlu0 %528
        %v530 = vadd.f32 %v485, %v486
        %531 = vadd.xlane.f32.xlu0 %v530
        %v532 = vpop.xlane.xlu0 %531
        %v533 = vadd.f32 %v487, %v488
        %534 = vadd.xlane.f32.xlu0 %v533
        %v535 = vpop.xlane.xlu0 %534
        %v536 = vadd.f32 %v489, %v490
        %537 = vadd.xlane.f32.xlu0 %v536
        %v538 = vpop.xlane.xlu0 %537
        %v539 = vmax.f32 %v493, 1e-12
        %v540 = vmax.f32 %v496, 1e-12
        %v541 = vmax.f32 %v499, 1e-12
        %v542 = vmax.f32 %v502, 1e-12
        %v543 = vmax.f32 %v505, 1e-12
        %v544 = vmax.f32 %v508, 1e-12
        %v545 = vmax.f32 %v511, 1e-12
        %v546 = vmax.f32 %v514, 1e-12
        %v547 = vmax.f32 %v517, 1e-12
        %v548 = vmax.f32 %v520, 1e-12
        %v549 = vmax.f32 %v523, 1e-12
        %v550 = vmax.f32 %v526, 1e-12
        %v551 = vmax.f32 %v529, 1e-12
        %v552 = vmax.f32 %v532, 1e-12
        %v553 = vmax.f32 %v535, 1e-12
        %v554 = vmax.f32 %v538, 1e-12
        %v555 = vrcp.pop %v539
        %v556 = vrcp.pop %v540
        %v557 = vrcp.pop %v541
        %v558 = vrcp.pop %v542
        %v559 = vrcp.pop %v543
        %v560 = vrcp.pop %v544
        %v561 = vrcp.pop %v545
        %v562 = vrcp.pop %v546
        %v563 = vrcp.pop %v547
        %v564 = vrcp.pop %v548
        %v565 = vrcp.pop %v549
        %v566 = vrcp.pop %v550
        %v567 = vrcp.pop %v551
        %v568 = vrcp.pop %v552
        %v569 = vrcp.pop %v553
        %v570 = vrcp.pop %v554
        %v571 = vmul.f32 %v427, %v555
        %v572 = vmul.f32 %v428, %v555
        %v573 = vmul.f32 %v429, %v556
        %v574 = vmul.f32 %v430, %v556
        %v575 = vmul.f32 %v431, %v557
        %v576 = vmul.f32 %v432, %v557
        %v577 = vmul.f32 %v433, %v558
        %v578 = vmul.f32 %v434, %v558
        %v579 = vmul.f32 %v435, %v559
        %v580 = vmul.f32 %v436, %v559
        %v581 = vmul.f32 %v437, %v560
        %v582 = vmul.f32 %v438, %v560
        %v583 = vmul.f32 %v439, %v561
        %v584 = vmul.f32 %v440, %v561
        %v585 = vmul.f32 %v441, %v562
        %v586 = vmul.f32 %v442, %v562
        %v587 = vmul.f32 %v443, %v563
        %v588 = vmul.f32 %v444, %v563
        %v589 = vmul.f32 %v445, %v564
        %v590 = vmul.f32 %v446, %v564
        %v591 = vmul.f32 %v447, %v565
        %v592 = vmul.f32 %v448, %v565
        %v593 = vmul.f32 %v449, %v566
        %v594 = vmul.f32 %v450, %v566
        %v595 = vmul.f32 %v451, %v567
        %v596 = vmul.f32 %v452, %v567
        %v597 = vmul.f32 %v453, %v568
        %v598 = vmul.f32 %v454, %v568
        %v599 = vmul.f32 %v455, %v569
        %v600 = vmul.f32 %v456, %v569
        %v601 = vmul.f32 %v457, %v570
        %v602 = vmul.f32 %v458, %v570
        %v603 = vld [vmem:[%s2] sm:$0xff]
        %v604 = vld [vmem:[%s2 + $0x8] sm:$0xff]
        %v605 = vld [vmem:[%s2 + $0x10] sm:$0xff]
        %v606 = vld [vmem:[%s2 + $0x18] sm:$0xff]
        %v607 = vld [vmem:[%s2 + $0x20] sm:$0xff]
        %v608 = vld [vmem:[%s2 + $0x28] sm:$0xff]
        %v609 = vld [vmem:[%s2 + $0x30] sm:$0xff]
        %v610 = vld [vmem:[%s2 + $0x38] sm:$0xff]
        %v611 = vld [vmem:[%s2 + $0x40] sm:$0xff]
        %v612 = vld [vmem:[%s2 + $0x48] sm:$0xff]
        %v613 = vld [vmem:[%s2 + $0x50] sm:$0xff]
        %v614 = vld [vmem:[%s2 + $0x58] sm:$0xff]
        %v615 = vld [vmem:[%s2 + $0x60] sm:$0xff]
        %v616 = vld [vmem:[%s2 + $0x68] sm:$0xff]
        %v617 = vld [vmem:[%s2 + $0x70] sm:$0xff]
        %v618 = vld [vmem:[%s2 + $0x78] sm:$0xff]
        %v619 = vld [vmem:[%s2 + $0x80] sm:$0xff]
        %v620 = vld [vmem:[%s2 + $0x88] sm:$0xff]
        %v621 = vld [vmem:[%s2 + $0x90] sm:$0xff]
        %v622 = vld [vmem:[%s2 + $0x98] sm:$0xff]
        %v623 = vld [vmem:[%s2 + $0xa0] sm:$0xff]
        %v624 = vld [vmem:[%s2 + $0xa8] sm:$0xff]
        %v625 = vld [vmem:[%s2 + $0xb0] sm:$0xff]
        %v626 = vld [vmem:[%s2 + $0xb8] sm:$0xff]
        %v627 = vld [vmem:[%s2 + $0xc0] sm:$0xff]
        %v628 = vld [vmem:[%s2 + $0xc8] sm:$0xff]
        %v629 = vld [vmem:[%s2 + $0xd0] sm:$0xff]
        %v630 = vld [vmem:[%s2 + $0xd8] sm:$0xff]
        %v631 = vld [vmem:[%s2 + $0xe0] sm:$0xff]
        %v632 = vld [vmem:[%s2 + $0xe8] sm:$0xff]
        %v633 = vld [vmem:[%s2 + $0xf0] sm:$0xff]
        %v634 = vld [vmem:[%s2 + $0xf8] sm:$0xff]
        %v635 = vld [vmem:[%s3] sm:$0x1]
        %v637 = vlaneseq
        %v638 = vshrl.u32 %v637, 7
        %v639 = vsub.s32 0, %v638
        %v640 = vrot.slane %v635, %v639
        %642 = vmatprep.subr.mxu0 0.0
        %643 = vmatpush1.msra.mxu0 %v618
        %644 = vmatprep.subr.mxu0 0.0
        %645 = vmatpush1.msra.mxu0 %v617
        %646 = vmatprep.subr.mxu0 0.0
        %647 = vmatpush1.msra.mxu0 %v616
        %648 = vmatprep.subr.mxu0 0.0
        %649 = vmatpush1.msra.mxu0 %v615
        %650 = vmatprep.subr.mxu0 0.0
        %651 = vmatpush1.msra.mxu0 %v614
        %652 = vmatprep.subr.mxu0 0.0
        %653 = vmatpush1.msra.mxu0 %v613
        %654 = vmatprep.subr.mxu0 0.0
        %655 = vmatpush1.msra.mxu0 %v612
        %656 = vmatprep.subr.mxu0 0.0
        %657 = vmatpush1.msra.mxu0 %v611
        %658 = vmatprep.subr.mxu0 0.0
        %659 = vmatpush1.msra.mxu0 %v610
        %660 = vmatprep.subr.mxu0 0.0
        %661 = vmatpush1.msra.mxu0 %v609
        %662 = vmatprep.subr.mxu0 0.0
        %663 = vmatpush1.msra.mxu0 %v608
        %664 = vmatprep.subr.mxu0 0.0
        %665 = vmatpush1.msra.mxu0 %v607
        %666 = vmatprep.subr.mxu0 0.0
        %667 = vmatpush1.msra.mxu0 %v606
        %668 = vmatprep.subr.mxu0 0.0
        %669 = vmatpush1.msra.mxu0 %v605
        %670 = vmatprep.subr.mxu0 0.0
        %671 = vmatpush1.msra.mxu0 %v604
        %672 = vmatprep.subr.mxu0 0.0
        %673 = vmatpush1.msra.mxu0 %v603
        %674 = vmatprep.subr.mxu0 0.0
        %675 = vmatpush2.msra.mxu0 %v634
        %676 = vmatprep.subr.mxu0 0.0
        %677 = vmatpush2.msra.mxu0 %v633
        %678 = vmatprep.subr.mxu0 0.0
        %679 = vmatpush2.msra.mxu0 %v632
        %680 = vmatprep.subr.mxu0 0.0
        %681 = vmatpush2.msra.mxu0 %v631
        %682 = vmatprep.subr.mxu0 0.0
        %683 = vmatpush2.msra.mxu0 %v630
        %684 = vmatprep.subr.mxu0 0.0
        %685 = vmatpush2.msra.mxu0 %v629
        %686 = vmatprep.subr.mxu0 0.0
        %687 = vmatpush2.msra.mxu0 %v628
        %688 = vmatprep.subr.mxu0 0.0
        %689 = vmatpush2.msra.mxu0 %v627
        %690 = vmatprep.subr.mxu0 0.0
        %691 = vmatpush2.msra.mxu0 %v626
        %692 = vmatprep.subr.mxu0 0.0
        %693 = vmatpush2.msra.mxu0 %v625
        %694 = vmatprep.subr.mxu0 0.0
        %695 = vmatpush2.msra.mxu0 %v624
        %696 = vmatprep.subr.mxu0 0.0
        %697 = vmatpush2.msra.mxu0 %v623
        %698 = vmatprep.subr.mxu0 0.0
        %699 = vmatpush2.msra.mxu0 %v622
        %700 = vmatprep.subr.mxu0 0.0
        %701 = vmatpush2.msra.mxu0 %v621
        %702 = vmatprep.subr.mxu0 0.0
        %703 = vmatpush2.msra.mxu0 %v620
        %704 = vmatprep.subr.mxu0 0.0
        %705 = vmatpush2.msra.mxu0 %v619
        %706 = vmatprep.mubr.f32.mxu0 %v572
        %707 = vmatmul.mubr.f32.gmra.mxu0 %v571
        %v708 = vpop.f32.mrf.mxu0
        %v709 = vadd.f32 %v640, %v708
        %v710 = vpop.f32.mrf.mxu0
        %711 = vmatprep.mubr.f32.mxu0 %v574
        %712 = vmatmul.mubr.f32.gmra.mxu0 %v573
        %v713 = vpop.f32.mrf.mxu0
        %v714 = vadd.f32 %v640, %v713
        %v715 = vpop.f32.mrf.mxu0
        %716 = vmatprep.mubr.f32.mxu0 %v576
        %717 = vmatmul.mubr.f32.gmra.mxu0 %v575
        %v718 = vpop.f32.mrf.mxu0
        %v719 = vadd.f32 %v640, %v718
        %v720 = vpop.f32.mrf.mxu0
        %721 = vmatprep.mubr.f32.mxu0 %v578
        %722 = vmatmul.mubr.f32.gmra.mxu0 %v577
        %v723 = vpop.f32.mrf.mxu0
        %v724 = vadd.f32 %v640, %v723
        %v725 = vpop.f32.mrf.mxu0
        %726 = vmatprep.mubr.f32.mxu0 %v580
        %727 = vmatmul.mubr.f32.gmra.mxu0 %v579
        %v728 = vpop.f32.mrf.mxu0
        %v729 = vadd.f32 %v640, %v728
        %v730 = vpop.f32.mrf.mxu0
        %731 = vmatprep.mubr.f32.mxu0 %v582
        %732 = vmatmul.mubr.f32.gmra.mxu0 %v581
        %v733 = vpop.f32.mrf.mxu0
        %v734 = vadd.f32 %v640, %v733
        %v735 = vpop.f32.mrf.mxu0
        %736 = vmatprep.mubr.f32.mxu0 %v584
        %737 = vmatmul.mubr.f32.gmra.mxu0 %v583
        %v738 = vpop.f32.mrf.mxu0
        %v739 = vadd.f32 %v640, %v738
        %v740 = vpop.f32.mrf.mxu0
        %741 = vmatprep.mubr.f32.mxu0 %v586
        %742 = vmatmul.mubr.f32.gmra.mxu0 %v585
        %v743 = vpop.f32.mrf.mxu0
        %v744 = vadd.f32 %v640, %v743
        %v745 = vpop.f32.mrf.mxu0
        %746 = vmatprep.mubr.f32.mxu0 %v588
        %747 = vmatmul.mubr.f32.gmra.mxu0 %v587
        %v748 = vpop.f32.mrf.mxu0
        %v749 = vadd.f32 %v640, %v748
        %v750 = vpop.f32.mrf.mxu0
        %751 = vmatprep.mubr.f32.mxu0 %v590
        %752 = vmatmul.mubr.f32.gmra.mxu0 %v589
        %v753 = vpop.f32.mrf.mxu0
        %v754 = vadd.f32 %v640, %v753
        %v755 = vpop.f32.mrf.mxu0
        %756 = vmatprep.mubr.f32.mxu0 %v592
        %757 = vmatmul.mubr.f32.gmra.mxu0 %v591
        %v758 = vpop.f32.mrf.mxu0
        %v759 = vadd.f32 %v640, %v758
        %v760 = vpop.f32.mrf.mxu0
        %761 = vmatprep.mubr.f32.mxu0 %v594
        %762 = vmatmul.mubr.f32.gmra.mxu0 %v593
        %v763 = vpop.f32.mrf.mxu0
        %v764 = vadd.f32 %v640, %v763
        %v765 = vpop.f32.mrf.mxu0
        %766 = vmatprep.mubr.f32.mxu0 %v596
        %767 = vmatmul.mubr.f32.gmra.mxu0 %v595
        %v768 = vpop.f32.mrf.mxu0
        %v769 = vadd.f32 %v640, %v768
        %v770 = vpop.f32.mrf.mxu0
        %771 = vmatprep.mubr.f32.mxu0 %v598
        %772 = vmatmul.mubr.f32.gmra.mxu0 %v597
        %v773 = vpop.f32.mrf.mxu0
        %v774 = vadd.f32 %v640, %v773
        %v775 = vpop.f32.mrf.mxu0
        %776 = vmatprep.mubr.f32.mxu0 %v600
        %777 = vmatmul.mubr.f32.gmra.mxu0 %v599
        %v778 = vpop.f32.mrf.mxu0
        %v779 = vadd.f32 %v640, %v778
        %v780 = vpop.f32.mrf.mxu0
        %781 = vmatprep.mubr.f32.mxu0 %v602
        %782 = vmatmul.mubr.f32.gmra.mxu0 %v601
        %v783 = vpop.f32.mrf.mxu0
        %v784 = vadd.f32 %v640, %v783
        %v785 = vpop.f32.mrf.mxu0
        %786 = vdwg.mxu0
        %v787 = vmax.f32 %v709, 0.0
        %v788 = vmax.f32 %v714, 0.0
        %v789 = vmax.f32 %v719, 0.0
        %v790 = vmax.f32 %v724, 0.0
        %v791 = vmax.f32 %v729, 0.0
        %v792 = vmax.f32 %v734, 0.0
        %v793 = vmax.f32 %v739, 0.0
        %v794 = vmax.f32 %v744, 0.0
        %v795 = vmax.f32 %v749, 0.0
        %v796 = vmax.f32 %v754, 0.0
        %v797 = vmax.f32 %v759, 0.0
        %v798 = vmax.f32 %v764, 0.0
        %v799 = vmax.f32 %v769, 0.0
        %v800 = vmax.f32 %v774, 0.0
        %v801 = vmax.f32 %v779, 0.0
        %v802 = vmax.f32 %v784, 0.0
        %v803 = vld [vmem:[%s4] sm:$0xff]
        %v804 = vld [vmem:[%s4 + $0x8] sm:$0xff]
        %v805 = vld [vmem:[%s4 + $0x10] sm:$0xff]
        %v806 = vld [vmem:[%s4 + $0x18] sm:$0xff]
        %v807 = vld [vmem:[%s4 + $0x20] sm:$0xff]
        %v808 = vld [vmem:[%s4 + $0x28] sm:$0xff]
        %v809 = vld [vmem:[%s4 + $0x30] sm:$0xff]
        %v810 = vld [vmem:[%s4 + $0x38] sm:$0xff]
        %v811 = vld [vmem:[%s4 + $0x40] sm:$0xff]
        %v812 = vld [vmem:[%s4 + $0x48] sm:$0xff]
        %v813 = vld [vmem:[%s4 + $0x50] sm:$0xff]
        %v814 = vld [vmem:[%s4 + $0x58] sm:$0xff]
        %v815 = vld [vmem:[%s4 + $0x60] sm:$0xff]
        %v816 = vld [vmem:[%s4 + $0x68] sm:$0xff]
        %v817 = vld [vmem:[%s4 + $0x70] sm:$0xff]
        %v818 = vld [vmem:[%s4 + $0x78] sm:$0xff]
        %v819 = vld [vmem:[%s5] sm:$0x1]
        %v821 = vlaneseq
        %v822 = vshrl.u32 %v821, 7
        %v823 = vsub.s32 0, %v822
        %v824 = vrot.slane %v819, %v823
        %826 = vmatprep.subr.mxu0 0.0
        %827 = vmatpush1.msra.mxu0 %v818
        %828 = vmatprep.subr.mxu0 0.0
        %829 = vmatpush1.msra.mxu0 %v817
        %830 = vmatprep.subr.mxu0 0.0
        %831 = vmatpush1.msra.mxu0 %v816
        %832 = vmatprep.subr.mxu0 0.0
        %833 = vmatpush1.msra.mxu0 %v815
        %834 = vmatprep.subr.mxu0 0.0
        %835 = vmatpush1.msra.mxu0 %v814
        %836 = vmatprep.subr.mxu0 0.0
        %837 = vmatpush1.msra.mxu0 %v813
        %838 = vmatprep.subr.mxu0 0.0
        %839 = vmatpush1.msra.mxu0 %v812
        %840 = vmatprep.subr.mxu0 0.0
        %841 = vmatpush1.msra.mxu0 %v811
        %842 = vmatprep.subr.mxu0 0.0
        %843 = vmatpush1.msra.mxu0 %v810
        %844 = vmatprep.subr.mxu0 0.0
        %845 = vmatpush1.msra.mxu0 %v809
        %846 = vmatprep.subr.mxu0 0.0
        %847 = vmatpush1.msra.mxu0 %v808
        %848 = vmatprep.subr.mxu0 0.0
        %849 = vmatpush1.msra.mxu0 %v807
        %850 = vmatprep.subr.mxu0 0.0
        %851 = vmatpush1.msra.mxu0 %v806
        %852 = vmatprep.subr.mxu0 0.0
        %853 = vmatpush1.msra.mxu0 %v805
        %854 = vmatprep.subr.mxu0 0.0
        %855 = vmatpush1.msra.mxu0 %v804
        %856 = vmatprep.subr.mxu0 0.0
        %857 = vmatpush1.msra.mxu0 %v803
        %858 = vmatprep.subr.mxu0 0.0
        %859 = vmatpush2.msra.mxu0 0.0
        %860 = vmatprep.subr.mxu0 0.0
        %861 = vmatpush2.msra.mxu0 0.0
        %862 = vmatprep.subr.mxu0 0.0
        %863 = vmatpush2.msra.mxu0 0.0
        %864 = vmatprep.subr.mxu0 0.0
        %865 = vmatpush2.msra.mxu0 0.0
        %866 = vmatprep.subr.mxu0 0.0
        %867 = vmatpush2.msra.mxu0 0.0
        %868 = vmatprep.subr.mxu0 0.0
        %869 = vmatpush2.msra.mxu0 0.0
        %870 = vmatprep.subr.mxu0 0.0
        %871 = vmatpush2.msra.mxu0 0.0
        %872 = vmatprep.subr.mxu0 0.0
        %873 = vmatpush2.msra.mxu0 0.0
        %874 = vmatprep.subr.mxu0 0.0
        %875 = vmatpush2.msra.mxu0 0.0
        %876 = vmatprep.subr.mxu0 0.0
        %877 = vmatpush2.msra.mxu0 0.0
        %878 = vmatprep.subr.mxu0 0.0
        %879 = vmatpush2.msra.mxu0 0.0
        %880 = vmatprep.subr.mxu0 0.0
        %881 = vmatpush2.msra.mxu0 0.0
        %882 = vmatprep.subr.mxu0 0.0
        %883 = vmatpush2.msra.mxu0 0.0
        %884 = vmatprep.subr.mxu0 0.0
        %885 = vmatpush2.msra.mxu0 0.0
        %886 = vmatprep.subr.mxu0 0.0
        %887 = vmatpush2.msra.mxu0 0.0
        %888 = vmatprep.subr.mxu0 0.0
        %889 = vmatpush2.msra.mxu0 0.0
        %890 = vmatprep.mubr.f32.mxu0 0.0
        %891 = vmatmul.mubr.f32.gmra.mxu0 %v787
        %v892 = vpop.f32.mrf.mxu0
        %v893 = vadd.f32 %v824, %v892
        %v894 = vpop.f32.mrf.mxu0
        %895 = vmatprep.mubr.f32.mxu0 0.0
        %896 = vmatmul.mubr.f32.gmra.mxu0 %v788
        %v897 = vpop.f32.mrf.mxu0
        %v898 = vadd.f32 %v824, %v897
        %v899 = vpop.f32.mrf.mxu0
        %900 = vmatprep.mubr.f32.mxu0 0.0
        %901 = vmatmul.mubr.f32.gmra.mxu0 %v789
        %v902 = vpop.f32.mrf.mxu0
        %v903 = vadd.f32 %v824, %v902
        %v904 = vpop.f32.mrf.mxu0
        %905 = vmatprep.mubr.f32.mxu0 0.0
        %906 = vmatmul.mubr.f32.gmra.mxu0 %v790
        %v907 = vpop.f32.mrf.mxu0
        %v908 = vadd.f32 %v824, %v907
        %v909 = vpop.f32.mrf.mxu0
        %910 = vmatprep.mubr.f32.mxu0 0.0
        %911 = vmatmul.mubr.f32.gmra.mxu0 %v791
        %v912 = vpop.f32.mrf.mxu0
        %v913 = vadd.f32 %v824, %v912
        %v914 = vpop.f32.mrf.mxu0
        %915 = vmatprep.mubr.f32.mxu0 0.0
        %916 = vmatmul.mubr.f32.gmra.mxu0 %v792
        %v917 = vpop.f32.mrf.mxu0
        %v918 = vadd.f32 %v824, %v917
        %v919 = vpop.f32.mrf.mxu0
        %920 = vmatprep.mubr.f32.mxu0 0.0
        %921 = vmatmul.mubr.f32.gmra.mxu0 %v793
        %v922 = vpop.f32.mrf.mxu0
        %v923 = vadd.f32 %v824, %v922
        %v924 = vpop.f32.mrf.mxu0
        %925 = vmatprep.mubr.f32.mxu0 0.0
        %926 = vmatmul.mubr.f32.gmra.mxu0 %v794
        %v927 = vpop.f32.mrf.mxu0
        %v928 = vadd.f32 %v824, %v927
        %v929 = vpop.f32.mrf.mxu0
        %930 = vmatprep.mubr.f32.mxu0 0.0
        %931 = vmatmul.mubr.f32.gmra.mxu0 %v795
        %v932 = vpop.f32.mrf.mxu0
        %v933 = vadd.f32 %v824, %v932
        %v934 = vpop.f32.mrf.mxu0
        %935 = vmatprep.mubr.f32.mxu0 0.0
        %936 = vmatmul.mubr.f32.gmra.mxu0 %v796
        %v937 = vpop.f32.mrf.mxu0
        %v938 = vadd.f32 %v824, %v937
        %v939 = vpop.f32.mrf.mxu0
        %940 = vmatprep.mubr.f32.mxu0 0.0
        %941 = vmatmul.mubr.f32.gmra.mxu0 %v797
        %v942 = vpop.f32.mrf.mxu0
        %v943 = vadd.f32 %v824, %v942
        %v944 = vpop.f32.mrf.mxu0
        %945 = vmatprep.mubr.f32.mxu0 0.0
        %946 = vmatmul.mubr.f32.gmra.mxu0 %v798
        %v947 = vpop.f32.mrf.mxu0
        %v948 = vadd.f32 %v824, %v947
        %v949 = vpop.f32.mrf.mxu0
        %950 = vmatprep.mubr.f32.mxu0 0.0
        %951 = vmatmul.mubr.f32.gmra.mxu0 %v799
        %v952 = vpop.f32.mrf.mxu0
        %v953 = vadd.f32 %v824, %v952
        %v954 = vpop.f32.mrf.mxu0
        %955 = vmatprep.mubr.f32.mxu0 0.0
        %956 = vmatmul.mubr.f32.gmra.mxu0 %v800
        %v957 = vpop.f32.mrf.mxu0
        %v958 = vadd.f32 %v824, %v957
        %v959 = vpop.f32.mrf.mxu0
        %960 = vmatprep.mubr.f32.mxu0 0.0
        %961 = vmatmul.mubr.f32.gmra.mxu0 %v801
        %v962 = vpop.f32.mrf.mxu0
        %v963 = vadd.f32 %v824, %v962
        %v964 = vpop.f32.mrf.mxu0
        %965 = vmatprep.mubr.f32.mxu0 0.0
        %966 = vmatmul.mubr.f32.gmra.mxu0 %v802
        %v967 = vpop.f32.mrf.mxu0
        %v968 = vadd.f32 %v824, %v967
        %v969 = vpop.f32.mrf.mxu0
        %970 = vdwg.mxu0
        %v971 = vld [vmem:[%s418] sm:$0xff]
        %v972 = vld [vmem:[%s418 + $0x8] sm:$0xff]
        %v973 = vld [vmem:[%s418 + $0x10] sm:$0xff]
        %v974 = vld [vmem:[%s418 + $0x18] sm:$0xff]
        %v975 = vld [vmem:[%s418 + $0x20] sm:$0xff]
        %v976 = vld [vmem:[%s418 + $0x28] sm:$0xff]
        %v977 = vld [vmem:[%s418 + $0x30] sm:$0xff]
        %v978 = vld [vmem:[%s418 + $0x38] sm:$0xff]
        %v979 = vld [vmem:[%s418 + $0x40] sm:$0xff]
        %v980 = vld [vmem:[%s418 + $0x48] sm:$0xff]
        %v981 = vld [vmem:[%s418 + $0x50] sm:$0xff]
        %v982 = vld [vmem:[%s418 + $0x58] sm:$0xff]
        %v983 = vld [vmem:[%s418 + $0x60] sm:$0xff]
        %v984 = vld [vmem:[%s418 + $0x68] sm:$0xff]
        %v985 = vld [vmem:[%s418 + $0x70] sm:$0xff]
        %v986 = vld [vmem:[%s418 + $0x78] sm:$0xff]
        %v987 = vmul.f32 %v893, 0.5
        %v988 = vmul.f32 %v898, 0.5
        %v989 = vmul.f32 %v903, 0.5
        %v990 = vmul.f32 %v908, 0.5
        %v991 = vmul.f32 %v913, 0.5
        %v992 = vmul.f32 %v918, 0.5
        %v993 = vmul.f32 %v923, 0.5
        %v994 = vmul.f32 %v928, 0.5
        %v995 = vmul.f32 %v933, 0.5
        %v996 = vmul.f32 %v938, 0.5
        %v997 = vmul.f32 %v943, 0.5
        %v998 = vmul.f32 %v948, 0.5
        %v999 = vmul.f32 %v953, 0.5
        %v1000 = vmul.f32 %v958, 0.5
        %v1001 = vmul.f32 %v963, 0.5
        %v1002 = vmul.f32 %v968, 0.5
        %v1003 = vmul.f32 %v987, 1.442695
        %v1004 = vpow.pop %v1003
        %v1005 = vmul.f32 %v988, 1.442695
        %v1006 = vpow.pop %v1005
        %v1007 = vmul.f32 %v989, 1.442695
        %v1008 = vpow.pop %v1007
        %v1009 = vmul.f32 %v990, 1.442695
        %v1010 = vpow.pop %v1009
        %v1011 = vmul.f32 %v991, 1.442695
        %v1012 = vpow.pop %v1011
        %v1013 = vmul.f32 %v992, 1.442695
        %v1014 = vpow.pop %v1013
        %v1015 = vmul.f32 %v993, 1.442695
        %v1016 = vpow.pop %v1015
        %v1017 = vmul.f32 %v994, 1.442695
        %v1018 = vpow.pop %v1017
        %v1019 = vmul.f32 %v995, 1.442695
        %v1020 = vpow.pop %v1019
        %v1021 = vmul.f32 %v996, 1.442695
        %v1022 = vpow.pop %v1021
        %v1023 = vmul.f32 %v997, 1.442695
        %v1024 = vpow.pop %v1023
        %v1025 = vmul.f32 %v998, 1.442695
        %v1026 = vpow.pop %v1025
        %v1027 = vmul.f32 %v999, 1.442695
        %v1028 = vpow.pop %v1027
        %v1029 = vmul.f32 %v1000, 1.442695
        %v1030 = vpow.pop %v1029
        %v1031 = vmul.f32 %v1001, 1.442695
        %v1032 = vpow.pop %v1031
        %v1033 = vmul.f32 %v1002, 1.442695
        %v1034 = vpow.pop %v1033
        %1051 = vrot.lane.b32.xlu0 %v1004, 64
        %v1052 = vpop.permute.xlu0 %1051
        %1053 = vrot.lane.b32.xlu0 %v1006, 64
        %v1054 = vpop.permute.xlu0 %1053
        %1055 = vrot.lane.b32.xlu0 %v1008, 64
        %v1056 = vpop.permute.xlu0 %1055
        %1057 = vrot.lane.b32.xlu0 %v1010, 64
        %v1058 = vpop.permute.xlu0 %1057
        %1059 = vrot.lane.b32.xlu0 %v1012, 64
        %v1060 = vpop.permute.xlu0 %1059
        %1061 = vrot.lane.b32.xlu0 %v1014, 64
        %v1062 = vpop.permute.xlu0 %1061
        %1063 = vrot.lane.b32.xlu0 %v1016, 64
        %v1064 = vpop.permute.xlu0 %1063
        %1065 = vrot.lane.b32.xlu0 %v1018, 64
        %v1066 = vpop.permute.xlu0 %1065
        %1067 = vrot.lane.b32.xlu0 %v1020, 64
        %v1068 = vpop.permute.xlu0 %1067
        %1069 = vrot.lane.b32.xlu0 %v1022, 64
        %v1070 = vpop.permute.xlu0 %1069
        %1071 = vrot.lane.b32.xlu0 %v1024, 64
        %v1072 = vpop.permute.xlu0 %1071
        %1073 = vrot.lane.b32.xlu0 %v1026, 64
        %v1074 = vpop.permute.xlu0 %1073
        %1075 = vrot.lane.b32.xlu0 %v1028, 64
        %v1076 = vpop.permute.xlu0 %1075
        %1077 = vrot.lane.b32.xlu0 %v1030, 64
        %v1078 = vpop.permute.xlu0 %1077
        %1079 = vrot.lane.b32.xlu0 %v1032, 64
        %v1080 = vpop.permute.xlu0 %1079
        %1081 = vrot.lane.b32.xlu0 %v1034, 64
        %v1082 = vpop.permute.xlu0 %1081
        %v1099 = vmul.f32 %v971, %v1052
        %v1100 = vmul.f32 %v972, %v1054
        %v1101 = vmul.f32 %v973, %v1056
        %v1102 = vmul.f32 %v974, %v1058
        %v1103 = vmul.f32 %v975, %v1060
        %v1104 = vmul.f32 %v976, %v1062
        %v1105 = vmul.f32 %v977, %v1064
        %v1106 = vmul.f32 %v978, %v1066
        %v1107 = vmul.f32 %v979, %v1068
        %v1108 = vmul.f32 %v980, %v1070
        %v1109 = vmul.f32 %v981, %v1072
        %v1110 = vmul.f32 %v982, %v1074
        %v1111 = vmul.f32 %v983, %v1076
        %v1112 = vmul.f32 %v984, %v1078
        %v1113 = vmul.f32 %v985, %v1080
        %v1114 = vmul.f32 %v986, %v1082
        %v1115 = vadd.f32 %v1099, %v893
        %v1116 = vadd.f32 %v1100, %v898
        %v1117 = vadd.f32 %v1101, %v903
        %v1118 = vadd.f32 %v1102, %v908
        %v1119 = vadd.f32 %v1103, %v913
        %v1120 = vadd.f32 %v1104, %v918
        %v1121 = vadd.f32 %v1105, %v923
        %v1122 = vadd.f32 %v1106, %v928
        %v1123 = vadd.f32 %v1107, %v933
        %v1124 = vadd.f32 %v1108, %v938
        %v1125 = vadd.f32 %v1109, %v943
        %v1126 = vadd.f32 %v1110, %v948
        %v1127 = vadd.f32 %v1111, %v953
        %v1128 = vadd.f32 %v1112, %v958
        %v1129 = vadd.f32 %v1113, %v963
        %v1130 = vadd.f32 %v1114, %v968
        %v1131 = vld [vmem:[%s6] sm:$0xff]
        %v1132 = vld [vmem:[%s6 + $0x8] sm:$0xff]
        %v1133 = vld [vmem:[%s6 + $0x10] sm:$0xff]
        %v1134 = vld [vmem:[%s6 + $0x18] sm:$0xff]
        %v1135 = vld [vmem:[%s6 + $0x20] sm:$0xff]
        %v1136 = vld [vmem:[%s6 + $0x28] sm:$0xff]
        %v1137 = vld [vmem:[%s6 + $0x30] sm:$0xff]
        %v1138 = vld [vmem:[%s6 + $0x38] sm:$0xff]
        %v1139 = vld [vmem:[%s7] sm:$0x1]
        %v1141 = vlaneseq
        %v1142 = vshrl.u32 %v1141, 7
        %v1143 = vsub.s32 0, %v1142
        %v1144 = vrot.slane %v1139, %v1143
        %vm1146 = vcmask 523264
        %v1148 = vsel %vm1146, %v1115, 0
        %v1151 = vsel %vm1146, %v1116, 0
        %v1154 = vsel %vm1146, %v1117, 0
        %v1157 = vsel %vm1146, %v1118, 0
        %v1160 = vsel %vm1146, %v1119, 0
        %v1163 = vsel %vm1146, %v1120, 0
        %v1166 = vsel %vm1146, %v1121, 0
        %v1169 = vsel %vm1146, %v1122, 0
        %v1172 = vsel %vm1146, %v1123, 0
        %v1175 = vsel %vm1146, %v1124, 0
        %v1178 = vsel %vm1146, %v1125, 0
        %v1181 = vsel %vm1146, %v1126, 0
        %v1184 = vsel %vm1146, %v1127, 0
        %v1187 = vsel %vm1146, %v1128, 0
        %v1190 = vsel %vm1146, %v1129, 0
        %v1193 = vsel %vm1146, %v1130, 0
        %1195 = vmatprep.subr.mxu0 0.0
        %1196 = vmatpush1.msra.mxu0 0.0
        %1197 = vmatprep.subr.mxu0 0.0
        %1198 = vmatpush1.msra.mxu0 0.0
        %1199 = vmatprep.subr.mxu0 0.0
        %1200 = vmatpush1.msra.mxu0 0.0
        %1201 = vmatprep.subr.mxu0 0.0
        %1202 = vmatpush1.msra.mxu0 0.0
        %1203 = vmatprep.subr.mxu0 0.0
        %1204 = vmatpush1.msra.mxu0 0.0
        %1205 = vmatprep.subr.mxu0 0.0
        %1206 = vmatpush1.msra.mxu0 0.0
        %1207 = vmatprep.subr.mxu0 0.0
        %1208 = vmatpush1.msra.mxu0 0.0
        %1209 = vmatprep.subr.mxu0 0.0
        %1210 = vmatpush1.msra.mxu0 0.0
        %1211 = vmatprep.subr.mxu0 0.0
        %1212 = vmatpush1.msra.mxu0 %v1138
        %1213 = vmatprep.subr.mxu0 0.0
        %1214 = vmatpush1.msra.mxu0 %v1137
        %1215 = vmatprep.subr.mxu0 0.0
        %1216 = vmatpush1.msra.mxu0 %v1136
        %1217 = vmatprep.subr.mxu0 0.0
        %1218 = vmatpush1.msra.mxu0 %v1135
        %1219 = vmatprep.subr.mxu0 0.0
        %1220 = vmatpush1.msra.mxu0 %v1134
        %1221 = vmatprep.subr.mxu0 0.0
        %1222 = vmatpush1.msra.mxu0 %v1133
        %1223 = vmatprep.subr.mxu0 0.0
        %1224 = vmatpush1.msra.mxu0 %v1132
        %1225 = vmatprep.subr.mxu0 0.0
        %1226 = vmatpush1.msra.mxu0 %v1131
        %1227 = vmatprep.subr.mxu0 0.0
        %1228 = vmatpush2.msra.mxu0 0.0
        %1229 = vmatprep.subr.mxu0 0.0
        %1230 = vmatpush2.msra.mxu0 0.0
        %1231 = vmatprep.subr.mxu0 0.0
        %1232 = vmatpush2.msra.mxu0 0.0
        %1233 = vmatprep.subr.mxu0 0.0
        %1234 = vmatpush2.msra.mxu0 0.0
        %1235 = vmatprep.subr.mxu0 0.0
        %1236 = vmatpush2.msra.mxu0 0.0
        %1237 = vmatprep.subr.mxu0 0.0
        %1238 = vmatpush2.msra.mxu0 0.0
        %1239 = vmatprep.subr.mxu0 0.0
        %1240 = vmatpush2.msra.mxu0 0.0
        %1241 = vmatprep.subr.mxu0 0.0
        %1242 = vmatpush2.msra.mxu0 0.0
        %1243 = vmatprep.subr.mxu0 0.0
        %1244 = vmatpush2.msra.mxu0 0.0
        %1245 = vmatprep.subr.mxu0 0.0
        %1246 = vmatpush2.msra.mxu0 0.0
        %1247 = vmatprep.subr.mxu0 0.0
        %1248 = vmatpush2.msra.mxu0 0.0
        %1249 = vmatprep.subr.mxu0 0.0
        %1250 = vmatpush2.msra.mxu0 0.0
        %1251 = vmatprep.subr.mxu0 0.0
        %1252 = vmatpush2.msra.mxu0 0.0
        %1253 = vmatprep.subr.mxu0 0.0
        %1254 = vmatpush2.msra.mxu0 0.0
        %1255 = vmatprep.subr.mxu0 0.0
        %1256 = vmatpush2.msra.mxu0 0.0
        %1257 = vmatprep.subr.mxu0 0.0
        %1258 = vmatpush2.msra.mxu0 0.0
        %1259 = vmatprep.mubr.f32.mxu0 0.0
        %1260 = vmatmul.mubr.f32.gmra.mxu0 %v1148
        %v1261 = vpop.f32.mrf.mxu0
        %v1262 = vadd.f32 %v1144, %v1261
        %v1263 = vpop.f32.mrf.mxu0
        %1264 = vmatprep.mubr.f32.mxu0 0.0
        %1265 = vmatmul.mubr.f32.gmra.mxu0 %v1151
        %v1266 = vpop.f32.mrf.mxu0
        %v1267 = vadd.f32 %v1144, %v1266
        %v1268 = vpop.f32.mrf.mxu0
        %1269 = vmatprep.mubr.f32.mxu0 0.0
        %1270 = vmatmul.mubr.f32.gmra.mxu0 %v1154
        %v1271 = vpop.f32.mrf.mxu0
        %v1272 = vadd.f32 %v1144, %v1271
        %v1273 = vpop.f32.mrf.mxu0
        %1274 = vmatprep.mubr.f32.mxu0 0.0
        %1275 = vmatmul.mubr.f32.gmra.mxu0 %v1157
        %v1276 = vpop.f32.mrf.mxu0
        %v1277 = vadd.f32 %v1144, %v1276
        %v1278 = vpop.f32.mrf.mxu0
        %1279 = vmatprep.mubr.f32.mxu0 0.0
        %1280 = vmatmul.mubr.f32.gmra.mxu0 %v1160
        %v1281 = vpop.f32.mrf.mxu0
        %v1282 = vadd.f32 %v1144, %v1281
        %v1283 = vpop.f32.mrf.mxu0
        %1284 = vmatprep.mubr.f32.mxu0 0.0
        %1285 = vmatmul.mubr.f32.gmra.mxu0 %v1163
        %v1286 = vpop.f32.mrf.mxu0
        %v1287 = vadd.f32 %v1144, %v1286
        %v1288 = vpop.f32.mrf.mxu0
        %1289 = vmatprep.mubr.f32.mxu0 0.0
        %1290 = vmatmul.mubr.f32.gmra.mxu0 %v1166
        %v1291 = vpop.f32.mrf.mxu0
        %v1292 = vadd.f32 %v1144, %v1291
        %v1293 = vpop.f32.mrf.mxu0
        %1294 = vmatprep.mubr.f32.mxu0 0.0
        %1295 = vmatmul.mubr.f32.gmra.mxu0 %v1169
        %v1296 = vpop.f32.mrf.mxu0
        %v1297 = vadd.f32 %v1144, %v1296
        %v1298 = vpop.f32.mrf.mxu0
        %1299 = vmatprep.mubr.f32.mxu0 0.0
        %1300 = vmatmul.mubr.f32.gmra.mxu0 %v1172
        %v1301 = vpop.f32.mrf.mxu0
        %v1302 = vadd.f32 %v1144, %v1301
        %v1303 = vpop.f32.mrf.mxu0
        %1304 = vmatprep.mubr.f32.mxu0 0.0
        %1305 = vmatmul.mubr.f32.gmra.mxu0 %v1175
        %v1306 = vpop.f32.mrf.mxu0
        %v1307 = vadd.f32 %v1144, %v1306
        %v1308 = vpop.f32.mrf.mxu0
        %1309 = vmatprep.mubr.f32.mxu0 0.0
        %1310 = vmatmul.mubr.f32.gmra.mxu0 %v1178
        %v1311 = vpop.f32.mrf.mxu0
        %v1312 = vadd.f32 %v1144, %v1311
        %v1313 = vpop.f32.mrf.mxu0
        %1314 = vmatprep.mubr.f32.mxu0 0.0
        %1315 = vmatmul.mubr.f32.gmra.mxu0 %v1181
        %v1316 = vpop.f32.mrf.mxu0
        %v1317 = vadd.f32 %v1144, %v1316
        %v1318 = vpop.f32.mrf.mxu0
        %1319 = vmatprep.mubr.f32.mxu0 0.0
        %1320 = vmatmul.mubr.f32.gmra.mxu0 %v1184
        %v1321 = vpop.f32.mrf.mxu0
        %v1322 = vadd.f32 %v1144, %v1321
        %v1323 = vpop.f32.mrf.mxu0
        %1324 = vmatprep.mubr.f32.mxu0 0.0
        %1325 = vmatmul.mubr.f32.gmra.mxu0 %v1187
        %v1326 = vpop.f32.mrf.mxu0
        %v1327 = vadd.f32 %v1144, %v1326
        %v1328 = vpop.f32.mrf.mxu0
        %1329 = vmatprep.mubr.f32.mxu0 0.0
        %1330 = vmatmul.mubr.f32.gmra.mxu0 %v1190
        %v1331 = vpop.f32.mrf.mxu0
        %v1332 = vadd.f32 %v1144, %v1331
        %v1333 = vpop.f32.mrf.mxu0
        %1334 = vmatprep.mubr.f32.mxu0 0.0
        %1335 = vmatmul.mubr.f32.gmra.mxu0 %v1193
        %v1336 = vpop.f32.mrf.mxu0
        %v1337 = vadd.f32 %v1144, %v1336
        %v1338 = vpop.f32.mrf.mxu0
        %1339 = vdwg.mxu0
        %v1340 = vmax.f32 %v1262, 0.0
        %v1341 = vmax.f32 %v1267, 0.0
        %v1342 = vmax.f32 %v1272, 0.0
        %v1343 = vmax.f32 %v1277, 0.0
        %v1344 = vmax.f32 %v1282, 0.0
        %v1345 = vmax.f32 %v1287, 0.0
        %v1346 = vmax.f32 %v1292, 0.0
        %v1347 = vmax.f32 %v1297, 0.0
        %v1348 = vmax.f32 %v1302, 0.0
        %v1349 = vmax.f32 %v1307, 0.0
        %v1350 = vmax.f32 %v1312, 0.0
        %v1351 = vmax.f32 %v1317, 0.0
        %v1352 = vmax.f32 %v1322, 0.0
        %v1353 = vmax.f32 %v1327, 0.0
        %v1354 = vmax.f32 %v1332, 0.0
        %v1355 = vmax.f32 %v1337, 0.0
        %v1356 = vld [vmem:[%s8] sm:$0xff]
        %v1357 = vld [vmem:[%s8 + $0x8] sm:$0xff]
        %v1358 = vld [vmem:[%s8 + $0x10] sm:$0xff]
        %v1359 = vld [vmem:[%s8 + $0x18] sm:$0xff]
        %v1360 = vld [vmem:[%s8 + $0x20] sm:$0xff]
        %v1361 = vld [vmem:[%s8 + $0x28] sm:$0xff]
        %v1362 = vld [vmem:[%s8 + $0x30] sm:$0xff]
        %v1363 = vld [vmem:[%s8 + $0x38] sm:$0xff]
        %v1364 = vld [vmem:[%s8 + $0x40] sm:$0xff]
        %v1365 = vld [vmem:[%s8 + $0x48] sm:$0xff]
        %v1366 = vld [vmem:[%s8 + $0x50] sm:$0xff]
        %v1367 = vld [vmem:[%s8 + $0x58] sm:$0xff]
        %v1368 = vld [vmem:[%s8 + $0x60] sm:$0xff]
        %v1369 = vld [vmem:[%s8 + $0x68] sm:$0xff]
        %v1370 = vld [vmem:[%s8 + $0x70] sm:$0xff]
        %v1371 = vld [vmem:[%s8 + $0x78] sm:$0xff]
        %v1372 = vld [vmem:[%s8 + $0x80] sm:$0xff]
        %v1373 = vld [vmem:[%s8 + $0x88] sm:$0xff]
        %v1374 = vld [vmem:[%s8 + $0x90] sm:$0xff]
        %v1375 = vld [vmem:[%s8 + $0x98] sm:$0xff]
        %v1376 = vld [vmem:[%s8 + $0xa0] sm:$0xff]
        %v1377 = vld [vmem:[%s8 + $0xa8] sm:$0xff]
        %v1378 = vld [vmem:[%s8 + $0xb0] sm:$0xff]
        %v1379 = vld [vmem:[%s8 + $0xb8] sm:$0xff]
        %v1380 = vld [vmem:[%s8 + $0xc0] sm:$0xff]
        %v1381 = vld [vmem:[%s8 + $0xc8] sm:$0xff]
        %v1382 = vld [vmem:[%s8 + $0xd0] sm:$0xff]
        %v1383 = vld [vmem:[%s8 + $0xd8] sm:$0xff]
        %v1384 = vld [vmem:[%s8 + $0xe0] sm:$0xff]
        %v1385 = vld [vmem:[%s8 + $0xe8] sm:$0xff]
        %v1386 = vld [vmem:[%s8 + $0xf0] sm:$0xff]
        %v1387 = vld [vmem:[%s8 + $0xf8] sm:$0xff]
        %v1388 = vld [vmem:[%s9] sm:$0x3]
        %v1390 = vlaneseq
        %v1391 = vshrl.u32 %v1390, 7
        %v1392 = vsub.s32 0, %v1391
        %v1393 = vrot.slane %v1388, %v1392
        %v1394 = vlaneseq
        %v1395 = vshrl.u32 %v1394, 7
        %v1396 = vsub.s32 1, %v1395
        %v1397 = vrot.slane %v1388, %v1396
        %1400 = vmatprep.subr.mxu0 %v1387
        %1401 = vmatpush1.msra.mxu0 %v1386
        %1402 = vmatprep.subr.mxu0 %v1385
        %1403 = vmatpush1.msra.mxu0 %v1384
        %1404 = vmatprep.subr.mxu0 %v1383
        %1405 = vmatpush1.msra.mxu0 %v1382
        %1406 = vmatprep.subr.mxu0 %v1381
        %1407 = vmatpush1.msra.mxu0 %v1380
        %1408 = vmatprep.subr.mxu0 %v1379
        %1409 = vmatpush1.msra.mxu0 %v1378
        %1410 = vmatprep.subr.mxu0 %v1377
        %1411 = vmatpush1.msra.mxu0 %v1376
        %1412 = vmatprep.subr.mxu0 %v1375
        %1413 = vmatpush1.msra.mxu0 %v1374
        %1414 = vmatprep.subr.mxu0 %v1373
        %1415 = vmatpush1.msra.mxu0 %v1372
        %1416 = vmatprep.subr.mxu0 %v1371
        %1417 = vmatpush1.msra.mxu0 %v1370
        %1418 = vmatprep.subr.mxu0 %v1369
        %1419 = vmatpush1.msra.mxu0 %v1368
        %1420 = vmatprep.subr.mxu0 %v1367
        %1421 = vmatpush1.msra.mxu0 %v1366
        %1422 = vmatprep.subr.mxu0 %v1365
        %1423 = vmatpush1.msra.mxu0 %v1364
        %1424 = vmatprep.subr.mxu0 %v1363
        %1425 = vmatpush1.msra.mxu0 %v1362
        %1426 = vmatprep.subr.mxu0 %v1361
        %1427 = vmatpush1.msra.mxu0 %v1360
        %1428 = vmatprep.subr.mxu0 %v1359
        %1429 = vmatpush1.msra.mxu0 %v1358
        %1430 = vmatprep.subr.mxu0 %v1357
        %1431 = vmatpush1.msra.mxu0 %v1356
        %1432 = vmatprep.subr.mxu0 0.0
        %1433 = vmatpush2.msra.mxu0 0.0
        %1434 = vmatprep.subr.mxu0 0.0
        %1435 = vmatpush2.msra.mxu0 0.0
        %1436 = vmatprep.subr.mxu0 0.0
        %1437 = vmatpush2.msra.mxu0 0.0
        %1438 = vmatprep.subr.mxu0 0.0
        %1439 = vmatpush2.msra.mxu0 0.0
        %1440 = vmatprep.subr.mxu0 0.0
        %1441 = vmatpush2.msra.mxu0 0.0
        %1442 = vmatprep.subr.mxu0 0.0
        %1443 = vmatpush2.msra.mxu0 0.0
        %1444 = vmatprep.subr.mxu0 0.0
        %1445 = vmatpush2.msra.mxu0 0.0
        %1446 = vmatprep.subr.mxu0 0.0
        %1447 = vmatpush2.msra.mxu0 0.0
        %1448 = vmatprep.subr.mxu0 0.0
        %1449 = vmatpush2.msra.mxu0 0.0
        %1450 = vmatprep.subr.mxu0 0.0
        %1451 = vmatpush2.msra.mxu0 0.0
        %1452 = vmatprep.subr.mxu0 0.0
        %1453 = vmatpush2.msra.mxu0 0.0
        %1454 = vmatprep.subr.mxu0 0.0
        %1455 = vmatpush2.msra.mxu0 0.0
        %1456 = vmatprep.subr.mxu0 0.0
        %1457 = vmatpush2.msra.mxu0 0.0
        %1458 = vmatprep.subr.mxu0 0.0
        %1459 = vmatpush2.msra.mxu0 0.0
        %1460 = vmatprep.subr.mxu0 0.0
        %1461 = vmatpush2.msra.mxu0 0.0
        %1462 = vmatprep.subr.mxu0 0.0
        %1463 = vmatpush2.msra.mxu0 0.0
        %1464 = vmatprep.mubr.f32.mxu0 0.0
        %1465 = vmatmul.mubr.f32.gmra.mxu0 %v1340
        %v1466 = vpop.f32.mrf.mxu0
        %v1467 = vadd.f32 %v1393, %v1466
        %v1468 = vpop.f32.mrf.mxu0
        %v1469 = vadd.f32 %v1397, %v1468
        %1470 = vmatprep.mubr.f32.mxu0 0.0
        %1471 = vmatmul.mubr.f32.gmra.mxu0 %v1341
        %v1472 = vpop.f32.mrf.mxu0
        %v1473 = vadd.f32 %v1393, %v1472
        %v1474 = vpop.f32.mrf.mxu0
        %v1475 = vadd.f32 %v1397, %v1474
        %1476 = vmatprep.mubr.f32.mxu0 0.0
        %1477 = vmatmul.mubr.f32.gmra.mxu0 %v1342
        %v1478 = vpop.f32.mrf.mxu0
        %v1479 = vadd.f32 %v1393, %v1478
        %v1480 = vpop.f32.mrf.mxu0
        %v1481 = vadd.f32 %v1397, %v1480
        %1482 = vmatprep.mubr.f32.mxu0 0.0
        %1483 = vmatmul.mubr.f32.gmra.mxu0 %v1343
        %v1484 = vpop.f32.mrf.mxu0
        %v1485 = vadd.f32 %v1393, %v1484
        %v1486 = vpop.f32.mrf.mxu0
        %v1487 = vadd.f32 %v1397, %v1486
        %1488 = vmatprep.mubr.f32.mxu0 0.0
        %1489 = vmatmul.mubr.f32.gmra.mxu0 %v1344
        %v1490 = vpop.f32.mrf.mxu0
        %v1491 = vadd.f32 %v1393, %v1490
        %v1492 = vpop.f32.mrf.mxu0
        %v1493 = vadd.f32 %v1397, %v1492
        %1494 = vmatprep.mubr.f32.mxu0 0.0
        %1495 = vmatmul.mubr.f32.gmra.mxu0 %v1345
        %v1496 = vpop.f32.mrf.mxu0
        %v1497 = vadd.f32 %v1393, %v1496
        %v1498 = vpop.f32.mrf.mxu0
        %v1499 = vadd.f32 %v1397, %v1498
        %1500 = vmatprep.mubr.f32.mxu0 0.0
        %1501 = vmatmul.mubr.f32.gmra.mxu0 %v1346
        %v1502 = vpop.f32.mrf.mxu0
        %v1503 = vadd.f32 %v1393, %v1502
        %v1504 = vpop.f32.mrf.mxu0
        %v1505 = vadd.f32 %v1397, %v1504
        %1506 = vmatprep.mubr.f32.mxu0 0.0
        %1507 = vmatmul.mubr.f32.gmra.mxu0 %v1347
        %v1508 = vpop.f32.mrf.mxu0
        %v1509 = vadd.f32 %v1393, %v1508
        %v1510 = vpop.f32.mrf.mxu0
        %v1511 = vadd.f32 %v1397, %v1510
        %1512 = vmatprep.mubr.f32.mxu0 0.0
        %1513 = vmatmul.mubr.f32.gmra.mxu0 %v1348
        %v1514 = vpop.f32.mrf.mxu0
        %v1515 = vadd.f32 %v1393, %v1514
        %v1516 = vpop.f32.mrf.mxu0
        %v1517 = vadd.f32 %v1397, %v1516
        %1518 = vmatprep.mubr.f32.mxu0 0.0
        %1519 = vmatmul.mubr.f32.gmra.mxu0 %v1349
        %v1520 = vpop.f32.mrf.mxu0
        %v1521 = vadd.f32 %v1393, %v1520
        %v1522 = vpop.f32.mrf.mxu0
        %v1523 = vadd.f32 %v1397, %v1522
        %1524 = vmatprep.mubr.f32.mxu0 0.0
        %1525 = vmatmul.mubr.f32.gmra.mxu0 %v1350
        %v1526 = vpop.f32.mrf.mxu0
        %v1527 = vadd.f32 %v1393, %v1526
        %v1528 = vpop.f32.mrf.mxu0
        %v1529 = vadd.f32 %v1397, %v1528
        %1530 = vmatprep.mubr.f32.mxu0 0.0
        %1531 = vmatmul.mubr.f32.gmra.mxu0 %v1351
        %v1532 = vpop.f32.mrf.mxu0
        %v1533 = vadd.f32 %v1393, %v1532
        %v1534 = vpop.f32.mrf.mxu0
        %v1535 = vadd.f32 %v1397, %v1534
        %1536 = vmatprep.mubr.f32.mxu0 0.0
        %1537 = vmatmul.mubr.f32.gmra.mxu0 %v1352
        %v1538 = vpop.f32.mrf.mxu0
        %v1539 = vadd.f32 %v1393, %v1538
        %v1540 = vpop.f32.mrf.mxu0
        %v1541 = vadd.f32 %v1397, %v1540
        %1542 = vmatprep.mubr.f32.mxu0 0.0
        %1543 = vmatmul.mubr.f32.gmra.mxu0 %v1353
        %v1544 = vpop.f32.mrf.mxu0
        %v1545 = vadd.f32 %v1393, %v1544
        %v1546 = vpop.f32.mrf.mxu0
        %v1547 = vadd.f32 %v1397, %v1546
        %1548 = vmatprep.mubr.f32.mxu0 0.0
        %1549 = vmatmul.mubr.f32.gmra.mxu0 %v1354
        %v1550 = vpop.f32.mrf.mxu0
        %v1551 = vadd.f32 %v1393, %v1550
        %v1552 = vpop.f32.mrf.mxu0
        %v1553 = vadd.f32 %v1397, %v1552
        %1554 = vmatprep.mubr.f32.mxu0 0.0
        %1555 = vmatmul.mubr.f32.gmra.mxu0 %v1355
        %v1556 = vpop.f32.mrf.mxu0
        %v1557 = vadd.f32 %v1393, %v1556
        %v1558 = vpop.f32.mrf.mxu0
        %v1559 = vadd.f32 %v1397, %v1558
        %1560 = vdwg.mxu0
        %v1561 = vxor.u32 %v1467, 2147483648
        %v1562 = vxor.u32 %v1469, 2147483648
        %v1563 = vxor.u32 %v1473, 2147483648
        %v1564 = vxor.u32 %v1475, 2147483648
        %v1565 = vxor.u32 %v1479, 2147483648
        %v1566 = vxor.u32 %v1481, 2147483648
        %v1567 = vxor.u32 %v1485, 2147483648
        %v1568 = vxor.u32 %v1487, 2147483648
        %v1569 = vxor.u32 %v1491, 2147483648
        %v1570 = vxor.u32 %v1493, 2147483648
        %v1571 = vxor.u32 %v1497, 2147483648
        %v1572 = vxor.u32 %v1499, 2147483648
        %v1573 = vxor.u32 %v1503, 2147483648
        %v1574 = vxor.u32 %v1505, 2147483648
        %v1575 = vxor.u32 %v1509, 2147483648
        %v1576 = vxor.u32 %v1511, 2147483648
        %v1577 = vxor.u32 %v1515, 2147483648
        %v1578 = vxor.u32 %v1517, 2147483648
        %v1579 = vxor.u32 %v1521, 2147483648
        %v1580 = vxor.u32 %v1523, 2147483648
        %v1581 = vxor.u32 %v1527, 2147483648
        %v1582 = vxor.u32 %v1529, 2147483648
        %v1583 = vxor.u32 %v1533, 2147483648
        %v1584 = vxor.u32 %v1535, 2147483648
        %v1585 = vxor.u32 %v1539, 2147483648
        %v1586 = vxor.u32 %v1541, 2147483648
        %v1587 = vxor.u32 %v1545, 2147483648
        %v1588 = vxor.u32 %v1547, 2147483648
        %v1589 = vxor.u32 %v1551, 2147483648
        %v1590 = vxor.u32 %v1553, 2147483648
        %v1591 = vxor.u32 %v1557, 2147483648
        %v1592 = vxor.u32 %v1559, 2147483648
        %v1593 = vmul.f32 %v1561, 1.442695
        %v1594 = vpow.pop %v1593
        %v1595 = vmul.f32 %v1562, 1.442695
        %v1596 = vpow.pop %v1595
        %v1597 = vmul.f32 %v1563, 1.442695
        %v1598 = vpow.pop %v1597
        %v1599 = vmul.f32 %v1564, 1.442695
        %v1600 = vpow.pop %v1599
        %v1601 = vmul.f32 %v1565, 1.442695
        %v1602 = vpow.pop %v1601
        %v1603 = vmul.f32 %v1566, 1.442695
        %v1604 = vpow.pop %v1603
        %v1605 = vmul.f32 %v1567, 1.442695
        %v1606 = vpow.pop %v1605
        %v1607 = vmul.f32 %v1568, 1.442695
        %v1608 = vpow.pop %v1607
        %v1609 = vmul.f32 %v1569, 1.442695
        %v1610 = vpow.pop %v1609
        %v1611 = vmul.f32 %v1570, 1.442695
        %v1612 = vpow.pop %v1611
        %v1613 = vmul.f32 %v1571, 1.442695
        %v1614 = vpow.pop %v1613
        %v1615 = vmul.f32 %v1572, 1.442695
        %v1616 = vpow.pop %v1615
        %v1617 = vmul.f32 %v1573, 1.442695
        %v1618 = vpow.pop %v1617
        %v1619 = vmul.f32 %v1574, 1.442695
        %v1620 = vpow.pop %v1619
        %v1621 = vmul.f32 %v1575, 1.442695
        %v1622 = vpow.pop %v1621
        %v1623 = vmul.f32 %v1576, 1.442695
        %v1624 = vpow.pop %v1623
        %v1625 = vmul.f32 %v1577, 1.442695
        %v1626 = vpow.pop %v1625
        %v1627 = vmul.f32 %v1578, 1.442695
        %v1628 = vpow.pop %v1627
        %v1629 = vmul.f32 %v1579, 1.442695
        %v1630 = vpow.pop %v1629
        %v1631 = vmul.f32 %v1580, 1.442695
        %v1632 = vpow.pop %v1631
        %v1633 = vmul.f32 %v1581, 1.442695
        %v1634 = vpow.pop %v1633
        %v1635 = vmul.f32 %v1582, 1.442695
        %v1636 = vpow.pop %v1635
        %v1637 = vmul.f32 %v1583, 1.442695
        %v1638 = vpow.pop %v1637
        %v1639 = vmul.f32 %v1584, 1.442695
        %v1640 = vpow.pop %v1639
        %v1641 = vmul.f32 %v1585, 1.442695
        %v1642 = vpow.pop %v1641
        %v1643 = vmul.f32 %v1586, 1.442695
        %v1644 = vpow.pop %v1643
        %v1645 = vmul.f32 %v1587, 1.442695
        %v1646 = vpow.pop %v1645
        %v1647 = vmul.f32 %v1588, 1.442695
        %v1648 = vpow.pop %v1647
        %v1649 = vmul.f32 %v1589, 1.442695
        %v1650 = vpow.pop %v1649
        %v1651 = vmul.f32 %v1590, 1.442695
        %v1652 = vpow.pop %v1651
        %v1653 = vmul.f32 %v1591, 1.442695
        %v1654 = vpow.pop %v1653
        %v1655 = vmul.f32 %v1592, 1.442695
        %v1656 = vpow.pop %v1655
        %v1657 = vadd.f32 %v1594, 1.0
        %v1658 = vadd.f32 %v1596, 1.0
        %v1659 = vadd.f32 %v1598, 1.0
        %v1660 = vadd.f32 %v1600, 1.0
        %v1661 = vadd.f32 %v1602, 1.0
        %v1662 = vadd.f32 %v1604, 1.0
        %v1663 = vadd.f32 %v1606, 1.0
        %v1664 = vadd.f32 %v1608, 1.0
        %v1665 = vadd.f32 %v1610, 1.0
        %v1666 = vadd.f32 %v1612, 1.0
        %v1667 = vadd.f32 %v1614, 1.0
        %v1668 = vadd.f32 %v1616, 1.0
        %v1669 = vadd.f32 %v1618, 1.0
        %v1670 = vadd.f32 %v1620, 1.0
        %v1671 = vadd.f32 %v1622, 1.0
        %v1672 = vadd.f32 %v1624, 1.0
        %v1673 = vadd.f32 %v1626, 1.0
        %v1674 = vadd.f32 %v1628, 1.0
        %v1675 = vadd.f32 %v1630, 1.0
        %v1676 = vadd.f32 %v1632, 1.0
        %v1677 = vadd.f32 %v1634, 1.0
        %v1678 = vadd.f32 %v1636, 1.0
        %v1679 = vadd.f32 %v1638, 1.0
        %v1680 = vadd.f32 %v1640, 1.0
        %v1681 = vadd.f32 %v1642, 1.0
        %v1682 = vadd.f32 %v1644, 1.0
        %v1683 = vadd.f32 %v1646, 1.0
        %v1684 = vadd.f32 %v1648, 1.0
        %v1685 = vadd.f32 %v1650, 1.0
        %v1686 = vadd.f32 %v1652, 1.0
        %v1687 = vadd.f32 %v1654, 1.0
        %v1688 = vadd.f32 %v1656, 1.0
        %v1689 = vrcp.pop %v1657
        %v1690 = vmul.f32 1.0, %v1689
        %v1691 = vrcp.pop %v1658
        %v1692 = vmul.f32 1.0, %v1691
        %v1693 = vrcp.pop %v1659
        %v1694 = vmul.f32 1.0, %v1693
        %v1695 = vrcp.pop %v1660
        %v1696 = vmul.f32 1.0, %v1695
        %v1697 = vrcp.pop %v1661
        %v1698 = vmul.f32 1.0, %v1697
        %v1699 = vrcp.pop %v1662
        %v1700 = vmul.f32 1.0, %v1699
        %v1701 = vrcp.pop %v1663
        %v1702 = vmul.f32 1.0, %v1701
        %v1703 = vrcp.pop %v1664
        %v1704 = vmul.f32 1.0, %v1703
        %v1705 = vrcp.pop %v1665
        %v1706 = vmul.f32 1.0, %v1705
        %v1707 = vrcp.pop %v1666
        %v1708 = vmul.f32 1.0, %v1707
        %v1709 = vrcp.pop %v1667
        %v1710 = vmul.f32 1.0, %v1709
        %v1711 = vrcp.pop %v1668
        %v1712 = vmul.f32 1.0, %v1711
        %v1713 = vrcp.pop %v1669
        %v1714 = vmul.f32 1.0, %v1713
        %v1715 = vrcp.pop %v1670
        %v1716 = vmul.f32 1.0, %v1715
        %v1717 = vrcp.pop %v1671
        %v1718 = vmul.f32 1.0, %v1717
        %v1719 = vrcp.pop %v1672
        %v1720 = vmul.f32 1.0, %v1719
        %v1721 = vrcp.pop %v1673
        %v1722 = vmul.f32 1.0, %v1721
        %v1723 = vrcp.pop %v1674
        %v1724 = vmul.f32 1.0, %v1723
        %v1725 = vrcp.pop %v1675
        %v1726 = vmul.f32 1.0, %v1725
        %v1727 = vrcp.pop %v1676
        %v1728 = vmul.f32 1.0, %v1727
        %v1729 = vrcp.pop %v1677
        %v1730 = vmul.f32 1.0, %v1729
        %v1731 = vrcp.pop %v1678
        %v1732 = vmul.f32 1.0, %v1731
        %v1733 = vrcp.pop %v1679
        %v1734 = vmul.f32 1.0, %v1733
        %v1735 = vrcp.pop %v1680
        %v1736 = vmul.f32 1.0, %v1735
        %v1737 = vrcp.pop %v1681
        %v1738 = vmul.f32 1.0, %v1737
        %v1739 = vrcp.pop %v1682
        %v1740 = vmul.f32 1.0, %v1739
        %v1741 = vrcp.pop %v1683
        %v1742 = vmul.f32 1.0, %v1741
        %v1743 = vrcp.pop %v1684
        %v1744 = vmul.f32 1.0, %v1743
        %v1745 = vrcp.pop %v1685
        %v1746 = vmul.f32 1.0, %v1745
        %v1747 = vrcp.pop %v1686
        %v1748 = vmul.f32 1.0, %v1747
        %v1749 = vrcp.pop %v1687
        %v1750 = vmul.f32 1.0, %v1749
        %v1751 = vrcp.pop %v1688
        %v1752 = vmul.f32 1.0, %v1751
        %1753 = vst [vmem:[%s399] sm:$0xff] %v1690
        %1754 = vst [vmem:[%s399 + $0x8] sm:$0xff] %v1692
        %1755 = vst [vmem:[%s399 + $0x10] sm:$0xff] %v1694
        %1756 = vst [vmem:[%s399 + $0x18] sm:$0xff] %v1696
        %1757 = vst [vmem:[%s399 + $0x20] sm:$0xff] %v1698
        %1758 = vst [vmem:[%s399 + $0x28] sm:$0xff] %v1700
        %1759 = vst [vmem:[%s399 + $0x30] sm:$0xff] %v1702
        %1760 = vst [vmem:[%s399 + $0x38] sm:$0xff] %v1704
        %1761 = vst [vmem:[%s399 + $0x40] sm:$0xff] %v1706
        %1762 = vst [vmem:[%s399 + $0x48] sm:$0xff] %v1708
        %1763 = vst [vmem:[%s399 + $0x50] sm:$0xff] %v1710
        %1764 = vst [vmem:[%s399 + $0x58] sm:$0xff] %v1712
        %1765 = vst [vmem:[%s399 + $0x60] sm:$0xff] %v1714
        %1766 = vst [vmem:[%s399 + $0x68] sm:$0xff] %v1716
        %1767 = vst [vmem:[%s399 + $0x70] sm:$0xff] %v1718
        %1768 = vst [vmem:[%s399 + $0x78] sm:$0xff] %v1720
        %1769 = vst [vmem:[%s399 + $0x80] sm:$0xff] %v1722
        %1770 = vst [vmem:[%s399 + $0x88] sm:$0xff] %v1724
        %1771 = vst [vmem:[%s399 + $0x90] sm:$0xff] %v1726
        %1772 = vst [vmem:[%s399 + $0x98] sm:$0xff] %v1728
        %1773 = vst [vmem:[%s399 + $0xa0] sm:$0xff] %v1730
        %1774 = vst [vmem:[%s399 + $0xa8] sm:$0xff] %v1732
        %1775 = vst [vmem:[%s399 + $0xb0] sm:$0xff] %v1734
        %1776 = vst [vmem:[%s399 + $0xb8] sm:$0xff] %v1736
        %1777 = vst [vmem:[%s399 + $0xc0] sm:$0xff] %v1738
        %1778 = vst [vmem:[%s399 + $0xc8] sm:$0xff] %v1740
        %1779 = vst [vmem:[%s399 + $0xd0] sm:$0xff] %v1742
        %1780 = vst [vmem:[%s399 + $0xd8] sm:$0xff] %v1744
        %1781 = vst [vmem:[%s399 + $0xe0] sm:$0xff] %v1746
        %1782 = vst [vmem:[%s399 + $0xe8] sm:$0xff] %v1748
        %1783 = vst [vmem:[%s399 + $0xf0] sm:$0xff] %v1750
        %1784 = vst [vmem:[%s399 + $0xf8] sm:$0xff] %v1752
        %1785 = vst [vmem:[%s425] sm:$0xff] %v893
        %1786 = vst [vmem:[%s425 + $0x8] sm:$0xff] %v898
        %1787 = vst [vmem:[%s425 + $0x10] sm:$0xff] %v903
        %1788 = vst [vmem:[%s425 + $0x18] sm:$0xff] %v908
        %1789 = vst [vmem:[%s425 + $0x20] sm:$0xff] %v913
        %1790 = vst [vmem:[%s425 + $0x28] sm:$0xff] %v918
        %1791 = vst [vmem:[%s425 + $0x30] sm:$0xff] %v923
        %1792 = vst [vmem:[%s425 + $0x38] sm:$0xff] %v928
        %1793 = vst [vmem:[%s425 + $0x40] sm:$0xff] %v933
        %1794 = vst [vmem:[%s425 + $0x48] sm:$0xff] %v938
        %1795 = vst [vmem:[%s425 + $0x50] sm:$0xff] %v943
        %1796 = vst [vmem:[%s425 + $0x58] sm:$0xff] %v948
        %1797 = vst [vmem:[%s425 + $0x60] sm:$0xff] %v953
        %1798 = vst [vmem:[%s425 + $0x68] sm:$0xff] %v958
        %1799 = vst [vmem:[%s425 + $0x70] sm:$0xff] %v963
        %1800 = vst [vmem:[%s425 + $0x78] sm:$0xff] %v968
        %s1801 = sand.u32 %s254, 1
        %s1802 = scalar_lea.sflag [#allocation3], %s1801
        %s1803 = sand.u32 %s254, 1
        %s1804 = smul.addr %s1803, 256
        %s1805 = scalar_lea.vmem [#allocation2], %s1804
        %s1806 = smul.u32 16, %s26
        %p1807 = scmp.lt.s32.totalorder %s1806, 31
        %s1808 = scalar_select %p1807, %s1806, 31
        %s1809 = smul.addr %s1808, 8
        %s1810 = scalar_lea.vmem %s11, %s1809
        // Predicated region
        $region61: #{vae_forward.1} parent=59 // pred_check
          %p1811 = pneg %p264
        $region62: #{vae_forward.1} parent=59 // pred_check_branch
          %1813 = sbr.rel (%p1811) target = $region64
        $region63: #{vae_forward.1} parent=59 // pred_region
          %s1814 = smul.u32 16, %s26
          %s1816 = ssub.s32 4096, 4096
          %1817 = vsyncadd %s1802, %s1816
          %s1818 = smul.addr %s1814, 2
          %s1819 = smul.addr %s1818, 128
          %s1820 = scalar_lea.hbm %s10, %s1819
          %s1821 = sshll.u32 %s1805, 4
          %s1822 = int_to_ptr.vmem [resolvable:$true] %s1821
          %1827 = dma.vmem_to_hbm [thread:$0]  %s1822, 4096, %s1820, %s1802, 256, 256, 16
        $region64: #{vae_forward.1} parent=59 // pred_fallthru
          _
        // Predicated region
        $region65: #{vae_forward.1} parent=59 // pred_check
          %p1828 = pneg %p290
        $region66: #{vae_forward.1} parent=59 // pred_check_branch
          %1830 = sbr.rel (%p1828) target = $region68
        $region67: #{vae_forward.1} parent=59 // pred_region
          %s1831 = smul.u32 16, %s26
        $region68: #{vae_forward.1} parent=59 // pred_fallthru
          _
      $region60: #{vae_forward.1} parent=5 // pred_fallthru
        _
      %p1832 = scmp.le.s32.totalorder 2, %s21
      // Predicated region
      $region69: #{vae_forward.1} parent=5 // pred_check
        %p1833 = pneg %p1832
      $region70: #{vae_forward.1} parent=5 // pred_check_branch
        %1835 = sbr.rel (%p1833) target = $region72
      $region71: #{vae_forward.1} parent=5 // pred_region
        %s1836 = ssub.s32 %s21, 2
        // Predicated region
        $region73: #{vae_forward.1} parent=71 // pred_check
          %p1837 = pneg %p270
        $region74: #{vae_forward.1} parent=71 // pred_check_branch
          %1839 = sbr.rel (%p1837) target = $region76
        $region75: #{vae_forward.1} parent=71 // pred_region
          %s1840 = sand.u32 %s255, 1
          %s1841 = scalar_lea.sflag [#allocation3], %s1840
          %s1842 = sand.u32 %s255, 1
          %s1843 = smul.addr %s1842, 256
          %s1844 = scalar_lea.vmem [#allocation2], %s1843
          %1845 = dma.done %s1841, 4096
        $region76: #{vae_forward.1} parent=71 // pred_fallthru
          _
        // Predicated region
        $region77: #{vae_forward.1} parent=71 // pred_check
          %p1846 = pneg %p296
        $region78: #{vae_forward.1} parent=71 // pred_check_branch
          %1848 = sbr.rel (%p1846) target = $region80
        $region79: #{vae_forward.1} parent=71 // pred_region
          %s1849 = smul.u32 16, %s27
          %p1850 = scmp.lt.s32.totalorder %s1849, 31
          %s1851 = scalar_select %p1850, %s1849, 31
          %s1852 = smul.addr %s1851, 8
          %s1853 = scalar_lea.vmem %s11, %s1852
        $region80: #{vae_forward.1} parent=71 // pred_fallthru
          _
      $region72: #{vae_forward.1} parent=5 // pred_fallthru
        _
    $region6: #{vae_forward.1} parent=1 // loop_footer
      %s25 = sadd.s32 1, %s21
    $region7: #{vae_forward.1} parent=1 // loop_footer_branch
      %20 = sbr.rel target = $region3
    $region8: #{vae_forward.1} parent=1 // loop_exit
      _
    %1854 = vsyncpa [#allocation3], 1
    %s1855 = scalar_lea.sflag [#allocation3], 1
    %1856 = vsyncpa %s1855, 1

</llo_original>
